<compile_context>
chip_gen: v6e
topology: v6e:2x2x1
jax: 0.10.0
libtpu: 0.0.40
codegen_flags: <defaults>
</compile_context>

<pallas_src>
import functools
import math

import jax
import jax.numpy as jnp
from jax.experimental import pallas as pl
from jax.experimental.pallas import tpu as pltpu

LEAKY = 0.01        # nn.LeakyReLU default negative_slope
BN_EPS = 1e-5
VMEM_LIMIT = 48 * 1024 * 1024   # safe on v5e/v6e (128 MiB) and v7x (64 MiB)


def _ceil(x, m):
    return ((x + m - 1) // m) * m


def _pick_tile(padded, cap):
    """padded is a multiple of 128; pick the largest tile <= cap dividing it."""
    t = min(padded, cap)
    while padded % t != 0:
        t -= 128
    return t


# ---------------------------------------------------------------------------
# Pallas kernel 1: fused im2col-matmul  Y = post(X @ W [, per-ch vecs, res])
#   X, W, residual are bf16 MXU operands; accumulation and epilogue math f32.
# ---------------------------------------------------------------------------
@functools.lru_cache(maxsize=None)
def _build_fused_matmul(Mp, Kp, Np, TM, TN, TK, mode, n_vec, has_res,
                        out_dtype_name, valid_n):
    out_dtype = jnp.dtype(out_dtype_name)

    def kernel(*refs):
        x_ref = refs[0]
        w_ref = refs[1]
        vec_refs = refs[2:2 + n_vec]
        pos = 2 + n_vec
        if has_res:
            r_ref = refs[pos]
            pos += 1
        else:
            r_ref = None
        o_ref = refs[pos]
        acc_ref = refs[pos + 1]

        kk = pl.program_id(2)

        @pl.when(kk == 0)
        def _():
            acc_ref[...] = jnp.zeros_like(acc_ref)

        acc_ref[...] += jnp.dot(x_ref[...], w_ref[...],
                                preferred_element_type=jnp.float32)

        @pl.when(kk == pl.num_programs(2) - 1)
        def _():
            y = acc_ref[...]
            if mode == "none":                       # conv + bias
                y = y + vec_refs[0][...]
            elif mode == "leaky":                    # leaky(conv + bias)
                y = y + vec_refs[0][...]
                y = jnp.where(y >= 0.0, y, LEAKY * y)
            elif mode == "bn":                       # bn(conv)   (bias folded)
                y = y * vec_refs[0][...] + vec_refs[1][...]
            elif mode == "bn_relu":                  # relu(bn(conv))
                y = jnp.maximum(y * vec_refs[0][...] + vec_refs[1][...], 0.0)
            elif mode == "bn_add_relu":              # relu(bn(conv) + residual)
                y = jnp.maximum(y * vec_refs[0][...] + vec_refs[1][...]
                                + r_ref[...].astype(jnp.float32), 0.0)
            elif mode == "act_bn":                   # bn(leaky(conv + bias))
                z = y + vec_refs[0][...]
                z = jnp.where(z >= 0.0, z, LEAKY * z)
                y = z * vec_refs[1][...] + vec_refs[2][...]
            elif mode == "act_bn_add":               # bn(leaky(conv+b)) + res
                z = y + vec_refs[0][...]
                z = jnp.where(z >= 0.0, z, LEAKY * z)
                y = (z * vec_refs[1][...] + vec_refs[2][...]
                     + r_ref[...].astype(jnp.float32))
            elif mode == "softmax":                  # softmax(conv + bias)
                y = y + vec_refs[0][...]
                lane = jax.lax.broadcasted_iota(jnp.int32, y.shape, 1)
                valid = lane < valid_n
                y = jnp.where(valid, y, -jnp.inf)
                m = jnp.max(y, axis=-1, keepdims=True)
                e = jnp.where(valid, jnp.exp(y - m), 0.0)
                y = e / jnp.sum(e, axis=-1, keepdims=True)
            o_ref[...] = y.astype(o_ref.dtype)

    in_specs = [
        pl.BlockSpec((TM, TK), lambda i, j, k: (i, k)),
        pl.BlockSpec((TK, TN), lambda i, j, k: (k, j)),
    ]
    for _ in range(n_vec):
        in_specs.append(pl.BlockSpec((1, TN), lambda i, j, k: (0, j)))
    if has_res:
        in_specs.append(pl.BlockSpec((TM, TN), lambda i, j, k: (i, j)))

    fn = pl.pallas_call(
        kernel,
        out_shape=jax.ShapeDtypeStruct((Mp, Np), out_dtype),
        grid_spec=pltpu.PrefetchScalarGridSpec(
            num_scalar_prefetch=0,
            grid=(Mp // TM, Np // TN, Kp // TK),
            in_specs=in_specs,
            out_specs=pl.BlockSpec((TM, TN), lambda i, j, k: (i, j)),
            scratch_shapes=[pltpu.VMEM((TM, TN), jnp.float32)],
        ),
        compiler_params=pltpu.CompilerParams(
            dimension_semantics=("parallel", "parallel", "arbitrary"),
            vmem_limit_bytes=VMEM_LIMIT),
    )
    return jax.jit(fn)


def fused_matmul(x, w, vecs, mode, residual=None,
                 out_dtype=jnp.bfloat16, valid_n=0):
    M, K = x.shape
    N = w.shape[1]
    Mp, Kp, Np = _ceil(M, 128), _ceil(K, 128), _ceil(N, 128)
    TM = _pick_tile(Mp, 512)
    TN = _pick_tile(Np, 256)
    TK = _pick_tile(Kp, 512)
    if mode == "softmax":
        assert Np == TN, "softmax epilogue requires a single N tile"

    xb = x.astype(jnp.bfloat16)
    if (Mp, Kp) != (M, K):
        xb = jnp.pad(xb, [(0, Mp - M), (0, Kp - K)])
    wb = w.astype(jnp.bfloat16)
    if (Kp, Np) != (K, N):
        wb = jnp.pad(wb, [(0, Kp - K), (0, Np - N)])

    args = [xb, wb]
    for v in vecs:
        v = v.astype(jnp.float32)
        if Np != N:
            v = jnp.pad(v, [(0, Np - N)])
        args.append(v[None, :])

    has_res = residual is not None
    if has_res:
        r = residual.astype(jnp.bfloat16)
        if (Mp, Np) != (M, N):
            r = jnp.pad(r, [(0, Mp - M), (0, Np - N)])
        args.append(r)

    fn = _build_fused_matmul(Mp, Kp, Np, TM, TN, TK, mode, len(vecs),
                             has_res, jnp.dtype(out_dtype).name, int(valid_n))
    out = fn(*args)
    if (Mp, Np) != (M, N):
        out = out[:M, :N]
    return out


# ---------------------------------------------------------------------------
# Pallas kernel 2: per-pixel batched matmul of PConv (lane-dense output)
#   out[p, kw, c] = sum_k2 g[p, kw, k2] * x[p, c, k2]
# ---------------------------------------------------------------------------
@functools.lru_cache(maxsize=None)
def _build_pixel_matmul(Pp, C, K2, KW, TP):
    def kernel(g_ref, x_ref, o_ref):
        o_ref[...] = jax.lax.dot_general(
            g_ref[...], x_ref[...],
            dimension_numbers=(((2,), (2,)), ((0,), (0,))),
            preferred_element_type=jnp.float32).astype(o_ref.dtype)

    fn = pl.pallas_call(
        kernel,
        out_shape=jax.ShapeDtypeStruct((Pp, KW, C), jnp.bfloat16),
        grid_spec=pltpu.PrefetchScalarGridSpec(
            num_scalar_prefetch=0,
            grid=(Pp // TP,),
            in_specs=[pl.BlockSpec((TP, KW, K2), lambda i: (i, 0, 0)),
                      pl.BlockSpec((TP, C, K2), lambda i: (i, 0, 0))],
            out_specs=pl.BlockSpec((TP, KW, C), lambda i: (i, 0, 0)),
        ),
        compiler_params=pltpu.CompilerParams(
            dimension_semantics=("parallel",),
            vmem_limit_bytes=VMEM_LIMIT),
    )
    return jax.jit(fn)


def pixel_matmul(xk, gk):
    """xk: (P, C, K2), gk: (P, KW, K2) -> (P, KW, C) in bf16."""
    P, C, K2 = xk.shape
    KW = gk.shape[1]
    TP = 256 if P >= 256 else _ceil(P, 8)
    Pp = _ceil(P, TP)
    xb = xk.astype(jnp.bfloat16)
    gb = gk.astype(jnp.bfloat16)
    if Pp != P:
        xb = jnp.pad(xb, [(0, Pp - P), (0, 0), (0, 0)])
        gb = jnp.pad(gb, [(0, Pp - P), (0, 0), (0, 0)])
    return _build_pixel_matmul(Pp, C, K2, KW, TP)(gb, xb)[:P]


# ---------------------------------------------------------------------------
# Pallas kernel 3: PMaxpooling  (feat * (mask != 0), max over neighborhood)
# ---------------------------------------------------------------------------
@functools.lru_cache(maxsize=None)
def _build_pmaxpool(Pp, K2, C, TP, dtype_name):
    dtype = jnp.dtype(dtype_name)

    def kernel(f_ref, m_ref, o_ref):
        f = f_ref[...].astype(jnp.float32)
        m = (m_ref[...] != 0.0).astype(jnp.float32)
        o_ref[...] = jnp.max(f * m, axis=1).astype(o_ref.dtype)

    fn = pl.pallas_call(
        kernel,
        out_shape=jax.ShapeDtypeStruct((Pp, C), dtype),
        grid_spec=pltpu.PrefetchScalarGridSpec(
            num_scalar_prefetch=0,
            grid=(Pp // TP,),
            in_specs=[pl.BlockSpec((TP, K2, C), lambda i: (i, 0, 0)),
                      pl.BlockSpec((TP, K2, 1), lambda i: (i, 0, 0))],
            out_specs=pl.BlockSpec((TP, C), lambda i: (i, 0)),
        ),
        compiler_params=pltpu.CompilerParams(
            dimension_semantics=("parallel",),
            vmem_limit_bytes=VMEM_LIMIT),
    )
    return jax.jit(fn)


def pmax_pool(feat, mask):
    P, K2, C = feat.shape
    TP = 256 if P >= 256 else _ceil(P, 8)
    Pp = _ceil(P, TP)
    fp = feat
    mp = mask.astype(jnp.float32)[:, :, None]
    if Pp != P:
        fp = jnp.pad(fp, [(0, Pp - P), (0, 0), (0, 0)])
        mp = jnp.pad(mp, [(0, Pp - P), (0, 0), (0, 0)])
    return _build_pmaxpool(Pp, K2, C, TP, jnp.dtype(feat.dtype).name)(fp, mp)[:P]


# ---------------------------------------------------------------------------
# JAX glue: im2col (F.unfold equivalent), conv / dense wrappers
# ---------------------------------------------------------------------------
def extract_patches(x, kh, kw, stride=1, dilation=1, padding=0):
    """x: (B, H, W, C) -> patches (B, Ho, Wo, kh*kw, C)."""
    B, H, W, C = x.shape
    xpad = jnp.pad(x, [(0, 0), (padding, padding), (padding, padding), (0, 0)])
    Ho = (H + 2 * padding - dilation * (kh - 1) - 1) // stride + 1
    Wo = (W + 2 * padding - dilation * (kw - 1) - 1) // stride + 1
    pats = []
    for i in range(kh):
        for j in range(kw):
            sl = xpad[:, i * dilation: i * dilation + (Ho - 1) * stride + 1: stride,
                         j * dilation: j * dilation + (Wo - 1) * stride + 1: stride, :]
            pats.append(sl)
    return jnp.stack(pats, axis=3), Ho, Wo


def bn_fold(bn):
    s = bn["gamma"] / jnp.sqrt(bn["var"] + BN_EPS)
    t = bn["beta"] - bn["mean"] * s
    return s, t


def _epilogue_vecs(mode, b, bn_p):
    if mode in ("bn", "bn_relu", "bn_add_relu"):
        s, t = bn_fold(bn_p)
        return (s, t + s * b)            # bias folded into BN shift
    if mode in ("act_bn", "act_bn_add"):
        s, t = bn_fold(bn_p)
        return (b, s, t)                 # bias precedes the activation
    return (b,)                          # none / leaky / softmax


def conv_layer(x, conv_p, stride=1, dilation=1, padding=0,
               mode="none", bn_p=None, residual=None,
               out_dtype=jnp.bfloat16):
    B, H, W, C = x.shape
    w = conv_p["w"]                      # (Cout, Cin, kh, kw)
    cout, cin, kh, kw = w.shape
    patches, Ho, Wo = extract_patches(x, kh, kw, stride, dilation, padding)
    X = patches.reshape(B * Ho * Wo, kh * kw * cin)
    w2 = jnp.transpose(w, (2, 3, 1, 0)).reshape(kh * kw * cin, cout)
    vecs = _epilogue_vecs(mode, conv_p["b"], bn_p)
    r = None if residual is None else residual.reshape(B * Ho * Wo, cout)
    valid_n = cout if mode == "softmax" else 0
    y = fused_matmul(X, w2, vecs, mode, r, out_dtype, valid_n)
    return y.reshape(B, Ho, Wo, cout)


def dense(x2d, conv_p, bn_p=None, mode="none", out_dtype=jnp.bfloat16):
    w = conv_p["w"]
    cout, cin = w.shape[0], w.shape[1]
    w2 = w.reshape(cout, cin).T
    vecs = _epilogue_vecs(mode, conv_p["b"], bn_p)
    return fused_matmul(x2d, w2, vecs, mode, out_dtype=out_dtype)


# ---------------------------------------------------------------------------
# Model blocks
# ---------------------------------------------------------------------------
def get_group_mask_fn(xyz, threshold, k=5, padding=2):
    """Plain-XLA version of get_group_mask (tiny elementwise work)."""
    B, H, W, _ = xyz.shape
    patches, _, _ = extract_patches(xyz, k, k, 1, 1, padding)   # (B,H,W,K2,3)
    gx = patches - xyz[:, :, :, None, :]
    d = jnp.sqrt(jnp.sum(gx * gx, axis=-1))                     # (B,H,W,K2)
    valid = (jnp.sum(xyz * xyz, axis=-1) > 0.0).astype(jnp.float32)[..., None]
    msk = (d < threshold).astype(jnp.float32)
    w = (1.0 / (d + 1e-4)) * msk * valid
    # PyTorch normalizes over dim=2 of (B, K2, H, W) == the H axis.
    norm = jnp.sum(w, axis=1, keepdims=True) + 1e-4
    return w / norm, gx


def basic_block(x, p):
    residual = x
    if p["downsample"] is not None:
        ds = p["downsample"]
        residual = conv_layer(x, ds["conv"], stride=p["stride"], padding=0,
                              mode="bn", bn_p=ds["bn"])
    out = conv_layer(x, p["conv1"], stride=p["stride"], padding=1,
                     mode="bn_relu", bn_p=p["bn1"])
    out = conv_layer(out, p["conv2"], padding=1,
                     mode="bn_add_relu", bn_p=p["bn2"], residual=residual)
    return out


def pconv(x, l_xyz, group_xyz, p):
    # mlp: 1x1 conv -> bn -> relu, at the *input* resolution
    for cp, bp in zip(p["mlp_convs"], p["mlp_bns"]):
        x = conv_layer(x, cp, mode="bn_relu", bn_p=bp)
    B, H, W, C = x.shape
    _, Ho, Wo, K2 = l_xyz.shape
    # WeightNet on localized xyz
    g = group_xyz.reshape(B * Ho * Wo * K2, 3)
    for cp, bp in zip(p["weightnet"]["convs"], p["weightnet"]["bns"]):
        g = dense(g, cp, bp, "bn_relu")
    KW = g.shape[-1]
    g = g.reshape(B * Ho * Wo, K2, KW)
    # unfold x with kernel 5, padding 2, stride 2
    patches, Ho2, Wo2 = extract_patches(x, 5, 5, stride=2, dilation=1, padding=2)
    assert (Ho2, Wo2) == (Ho, Wo)
    P = B * Ho * Wo
    xk = jnp.transpose(patches.reshape(P, K2, C), (0, 2, 1))    # (P, C, K2)
    gk = jnp.transpose(g, (0, 2, 1))                            # (P, KW, K2)
    out = pixel_matmul(xk, gk).reshape(P, KW * C)               # lane-dense (kw-major)
    # PyTorch flattens (C, KW) c-major; permute linear weight to kw-major order.
    lw = p["linear"]["w"].reshape(-1, C, KW)
    lw = jnp.transpose(lw, (0, 2, 1)).reshape(-1, KW * C, 1, 1)
    linear_p = {"w": lw, "b": p["linear"]["b"]}
    y = dense(out, linear_p, p["bn_linear"], "bn_relu")
    return y.reshape(B, Ho, Wo, C)


def res_block(x, l_xyz, group_xyz, p, pooling):
    shortcut = conv_layer(x, p["conv1"], mode="leaky")
    resA1 = conv_layer(x, p["conv2"], padding=1, mode="act_bn", bn_p=p["bn1"])
    resA2 = conv_layer(resA1, p["conv3"], dilation=2, padding=2,
                       mode="act_bn", bn_p=p["bn2"])
    resA3 = conv_layer(resA2, p["conv4"], dilation=2, padding=1,
                       mode="act_bn", bn_p=p["bn3"])
    concat = jnp.concatenate([resA1, resA2, resA3], axis=-1)
    resA = conv_layer(concat, p["conv5"], mode="act_bn_add",
                      bn_p=p["bn4"], residual=shortcut)
    if pooling:
        resB = pconv(resA, l_xyz, group_xyz, p["pconv_d"])  # dropout == identity
        return resB, resA
    return resA


def pdconv(x_pre, x, group_mask, factor=2, k=5, padding=2):
    B, H, W, C = x.shape
    up = jnp.zeros((B, H * factor, W * factor, C), x.dtype)
    up = up.at[:, ::factor, ::factor, :].set(x)
    patches, Ho, Wo = extract_patches(up, k, k, 1, 1, padding)
    P = B * Ho * Wo
    feat = patches.reshape(P, k * k, C)
    mask = group_mask.reshape(P, k * k)
    out = pmax_pool(feat, mask).reshape(B, Ho, Wo, C)
    if x_pre is not None:
        out = jnp.concatenate([out, x_pre.astype(out.dtype)], axis=-1)
    return out


def up_block(x, skip, l_xyz, p):
    upB = pdconv(skip, x, l_xyz, factor=2, k=5, padding=2)
    upE1 = conv_layer(upB, p["conv1"], padding=1, mode="act_bn", bn_p=p["bn1"])
    upE2 = conv_layer(upE1, p["conv2"], dilation=2, padding=2,
                      mode="act_bn", bn_p=p["bn2"])
    upE3 = conv_layer(upE2, p["conv3"], dilation=2, padding=1,
                      mode="act_bn", bn_p=p["bn3"])
    concat = jnp.concatenate([upE1, upE2, upE3], axis=-1)
    upE = conv_layer(concat, p["conv4"], mode="act_bn", bn_p=p["bn4"])
    return upE


# ---------------------------------------------------------------------------
# Deterministic parameter initialization
# ---------------------------------------------------------------------------
_PKEY = jax.random.PRNGKey(0)
_PCOUNT = [0]


def _rand(shape, scale):
    _PCOUNT[0] += 1
    k = jax.random.fold_in(_PKEY, _PCOUNT[0])
    return jax.random.normal(k, shape, jnp.float32) * scale


def make_conv(cin, cout, kh, kw, bias=True):
    fan_in = cin * kh * kw
    w = _rand((cout, cin, kh, kw), 1.0 / math.sqrt(fan_in))
    b = _rand((cout,), 0.01) if bias else jnp.zeros((cout,), jnp.float32)
    return {"w": w, "b": b}


def make_bn(c):
    return {"gamma": 1.0 + _rand((c,), 0.05), "beta": _rand((c,), 0.05),
            "mean": jnp.zeros((c,), jnp.float32),
            "var": jnp.ones((c,), jnp.float32)}


def make_weightnet(ci, co, hidden=(8, 8)):
    convs = [make_conv(ci, hidden[0], 1, 1)]
    bns = [make_bn(hidden[0])]
    for i in range(1, len(hidden)):
        convs.append(make_conv(hidden[i - 1], hidden[i], 1, 1))
        bns.append(make_bn(hidden[i]))
    convs.append(make_conv(hidden[-1], co, 1, 1))
    bns.append(make_bn(co))
    return {"convs": convs, "bns": bns}


def make_pconv(cin, mlp):
    convs, bns = [], []
    last = cin
    for oc in mlp:
        convs.append(make_conv(last, oc, 1, 1))
        bns.append(make_bn(oc))
        last = oc
    return {"mlp_convs": convs, "mlp_bns": bns,
            "linear": make_conv(16 * mlp[-1], mlp[-1], 1, 1),
            "bn_linear": make_bn(mlp[-1]),
            "weightnet": make_weightnet(3, 16)}


def make_resblock(cin, cout, pooling):
    p = {"conv1": make_conv(cin, cout, 1, 1),
         "conv2": make_conv(cin, cout, 3, 3), "bn1": make_bn(cout),
         "conv3": make_conv(cout, cout, 3, 3), "bn2": make_bn(cout),
         "conv4": make_conv(cout, cout, 2, 2), "bn3": make_bn(cout),
         "conv5": make_conv(cout * 3, cout, 1, 1), "bn4": make_bn(cout)}
    if pooling:
        p["pconv_d"] = make_pconv(cout, [cout, cout, cout])
    return p


def make_upblock(outf, inf_):
    return {"conv1": make_conv(inf_, outf, 3, 3), "bn1": make_bn(outf),
            "conv2": make_conv(outf, outf, 3, 3), "bn2": make_bn(outf),
            "conv3": make_conv(outf, outf, 2, 2), "bn3": make_bn(outf),
            "conv4": make_conv(outf * 3, outf, 1, 1), "bn4": make_bn(outf)}


def init_params(nclasses):
    params = {}
    blocks = []
    inpl = 5                       # block_in is hard-coded to 5 input channels
    for i in range(8):
        blk = {"conv1": make_conv(inpl, 32, 3, 3, bias=False), "bn1": make_bn(32),
               "conv2": make_conv(32, 32, 3, 3, bias=False), "bn2": make_bn(32),
               "downsample": None, "stride": 1}
        if i == 0 and inpl != 32:
            blk["downsample"] = {"conv": make_conv(inpl, 32, 1, 1, bias=False),
                                 "bn": make_bn(32)}
        blocks.append(blk)
        inpl = 32
    params["block_in"] = blocks
    params["resBlock1"] = make_resblock(32, 64, True)
    params["resBlock2"] = make_resblock(64, 128, True)
    params["resBlock3"] = make_resblock(128, 256, True)
    params["resBlock4"] = make_resblock(256, 256, True)
    params["resBlock5"] = make_resblock(256, 256, False)
    params["upBlock1"] = make_upblock(128, 512)
    params["upBlock2"] = make_upblock(128, 384)
    params["upBlock3"] = make_upblock(64, 256)
    params["upBlock4"] = make_upblock(32, 128)
    params["logits"] = make_conv(32, nclasses, 1, 1)
    return params


# ---------------------------------------------------------------------------
# UnpNet forward
# ---------------------------------------------------------------------------
def unpnet_forward(x_nchw, params):
    x = jnp.transpose(x_nchw, (0, 2, 3, 1)).astype(jnp.float32)   # NHWC
    xyz0 = x[..., 1:4]
    l0, g0 = get_group_mask_fn(xyz0, 0.2)
    xyz1 = xyz0[:, ::2, ::2, :]           # F.interpolate(scale=0.5, 'nearest')
    l1, g1 = get_group_mask_fn(xyz1, 0.2)
    xyz2 = xyz1[:, ::2, ::2, :]
    l2, g2 = get_group_mask_fn(xyz2, 0.4)
    xyz3 = xyz2[:, ::2, ::2, :]
    l3, g3 = get_group_mask_fn(xyz3, 0.6)
    xyz4 = xyz3[:, ::2, ::2, :]
    l4, g4 = get_group_mask_fn(xyz4, 0.8)

    downCntx = x
    for blk in params["block_in"]:
        downCntx = basic_block(downCntx, blk)

    down0c, down0b = res_block(downCntx, l1, g1, params["resBlock1"], True)
    down1c, down1b = res_block(down0c, l2, g2, params["resBlock2"], True)
    down2c, down2b = res_block(down1c, l3, g3, params["resBlock3"], True)
    down3c, down3b = res_block(down2c, l4, g4, params["resBlock4"], True)
    down5c = res_block(down3c, None, None, params["resBlock5"], False)

    up4e = up_block(down5c, down3b, l3, params["upBlock1"])
    up3e = up_block(up4e, down2b, l2, params["upBlock2"])
    up2e = up_block(up3e, down1b, l1, params["upBlock3"])
    up1e = up_block(up2e, down0b, l0, params["upBlock4"])

    # logits conv + channel softmax fused in one Pallas epilogue (f32 output)
    probs = conv_layer(up1e, params["logits"], mode="softmax",
                       out_dtype=jnp.float32)
    return jnp.transpose(probs, (0, 3, 1, 2)), {}


# ---------------------------------------------------------------------------
if __name__ == "__main__":
    B, CIN, H, W = 2, 5, 16, 16
    NCLASSES = 8
    key = jax.random.PRNGKey(0)
    x = jax.random.normal(key, (B, CIN, H, W), jnp.float32)

    params = init_params(NCLASSES)
    probs, aux = unpnet_forward(x, params)
    probs = jax.block_until_ready(probs)

    assert probs.shape == (B, NCLASSES, H, W)
    assert bool(jnp.all(jnp.isfinite(probs)))
    assert bool(jnp.allclose(jnp.sum(probs, axis=1), 1.0, atol=1e-4))
    print("KERNEL_OK")
</pallas_src>

<mosaic_0001>
module attributes {stable_mosaic.version = 11 : i64} {
  func.func @kernel(%arg0: i32, %arg1: i32, %arg2: i32, %arg3: memref<512x128xbf16, #tpu.memory_space<vmem>>, %arg4: memref<128x128xbf16, #tpu.memory_space<vmem>>, %arg5: memref<1x128xf32, #tpu.memory_space<vmem>>, %arg6: memref<1x128xf32, #tpu.memory_space<vmem>>, %arg7: memref<512x128xbf16, #tpu.memory_space<vmem>>, %arg8: memref<512x128xf32, #tpu.memory_space<vmem>>) attributes {dimension_semantics = [#tpu.dimension_semantics<parallel>, #tpu.dimension_semantics<parallel>, #tpu.dimension_semantics<arbitrary>], iteration_bounds = array<i64: 1, 1, 1>, scalar_prefetch = 0 : i64, scratch_operands = 1 : i64, tpu.core_type = #tpu.core_type<tc>, window_params = [{transform_indices = @transform_0, window_bounds = array<i64: 512, 128>}, {transform_indices = @transform_1, window_bounds = array<i64: 128, 128>}, {transform_indices = @transform_2, window_bounds = array<i64: 1, 128>}, {transform_indices = @transform_3, window_bounds = array<i64: 1, 128>}, {transform_indices = @transform_4, window_bounds = array<i64: 512, 128>}]} {
    %c0_i32 = arith.constant 0 : i32
    %0 = arith.cmpi eq, %arg2, %c0_i32 : i32
    %1 = arith.extui %0 : i1 to i32
    %c0_i32_0 = arith.constant 0 : i32
    %2 = arith.cmpi ne, %1, %c0_i32_0 : i32
    scf.if %2 {
      %cst_10 = arith.constant 0.000000e+00 : f32
      %12 = vector.broadcast %cst_10 : f32 to vector<512x128xf32>
      %c0_11 = arith.constant 0 : index
      %c0_12 = arith.constant 0 : index
      %13 = vector.load %arg8[%c0_11, %c0_12] : memref<512x128xf32, #tpu.memory_space<vmem>>, vector<512x128xf32>
      tpu.vector_store %arg8[%c0_11, %c0_12], %12 {strides = array<i32>} : memref<512x128xf32, #tpu.memory_space<vmem>>, vector<512x128xf32>,
    } else {
    }
    %c0 = arith.constant 0 : index
    %c0_1 = arith.constant 0 : index
    %3 = vector.load %arg8[%c0, %c0_1] : memref<512x128xf32, #tpu.memory_space<vmem>>, vector<512x128xf32>
    %c0_2 = arith.constant 0 : index
    %c0_3 = arith.constant 0 : index
    %4 = vector.load %arg3[%c0_2, %c0_3] : memref<512x128xbf16, #tpu.memory_space<vmem>>, vector<512x128xbf16>
    %c0_4 = arith.constant 0 : index
    %c0_5 = arith.constant 0 : index
    %5 = vector.load %arg4[%c0_4, %c0_5] : memref<128x128xbf16, #tpu.memory_space<vmem>>, vector<128x128xbf16>
    %cst = arith.constant dense<0.000000e+00> : vector<512x128xf32>
    %6 = tpu.matmul %4, %5, %cst {dimension_numbers = #tpu.dot_dimension_numbers<[1], [0], [0], [1], [0, 0, 1, 1], [], []>} : vector<512x128xbf16>, vector<128x128xbf16>, vector<512x128xf32> -> vector<512x128xf32>
    %7 = arith.addf %3, %6 : vector<512x128xf32>
    %c0_6 = arith.constant 0 : index
    %c0_7 = arith.constant 0 : index
    %8 = vector.load %arg8[%c0_6, %c0_7] : memref<512x128xf32, #tpu.memory_space<vmem>>, vector<512x128xf32>
    tpu.vector_store %arg8[%c0_6, %c0_7], %7 {strides = array<i32>} : memref<512x128xf32, #tpu.memory_space<vmem>>, vector<512x128xf32>,
    %c0_i32_8 = arith.constant 0 : i32
    %9 = arith.cmpi eq, %arg2, %c0_i32_8 : i32
    %10 = arith.extui %9 : i1 to i32
    %c0_i32_9 = arith.constant 0 : i32
    %11 = arith.cmpi ne, %10, %c0_i32_9 : i32
    scf.if %11 {
      %c0_10 = arith.constant 0 : index
      %c0_11 = arith.constant 0 : index
      %12 = vector.load %arg8[%c0_10, %c0_11] : memref<512x128xf32, #tpu.memory_space<vmem>>, vector<512x128xf32>
      %c0_12 = arith.constant 0 : index
      %c0_13 = arith.constant 0 : index
      %13 = vector.load %arg5[%c0_12, %c0_13] : memref<1x128xf32, #tpu.memory_space<vmem>>, vector<1x128xf32>
      %14 = vector.broadcast %13 : vector<1x128xf32> to vector<512x128xf32>
      %15 = arith.mulf %12, %14 : vector<512x128xf32>
      %c0_14 = arith.constant 0 : index
      %c0_15 = arith.constant 0 : index
      %16 = vector.load %arg6[%c0_14, %c0_15] : memref<1x128xf32, #tpu.memory_space<vmem>>, vector<1x128xf32>
      %17 = vector.broadcast %16 : vector<1x128xf32> to vector<512x128xf32>
      %18 = arith.addf %15, %17 : vector<512x128xf32>
      %19 = arith.truncf %18 : vector<512x128xf32> to vector<512x128xbf16>
      %c0_16 = arith.constant 0 : index
      %c0_17 = arith.constant 0 : index
      %20 = vector.load %arg7[%c0_16, %c0_17] : memref<512x128xbf16, #tpu.memory_space<vmem>>, vector<512x128xbf16>
      tpu.vector_store %arg7[%c0_16, %c0_17], %19 {strides = array<i32>} : memref<512x128xbf16, #tpu.memory_space<vmem>>, vector<512x128xbf16>,
    } else {
    }
    return
  }
  func.func @transform_0(%arg0: i32, %arg1: i32, %arg2: i32) -> (i32, i32) {
    %c0_i32 = arith.constant 0 : i32
    return %arg0, %arg2 : i32, i32
  }
  func.func @transform_1(%arg0: i32, %arg1: i32, %arg2: i32) -> (i32, i32) {
    %c0_i32 = arith.constant 0 : i32
    return %arg2, %arg1 : i32, i32
  }
  func.func @transform_2(%arg0: i32, %arg1: i32, %arg2: i32) -> (i32, i32) {
    %c0_i32 = arith.constant 0 : i32
    %c0_i32_0 = arith.constant 0 : i32
    return %c0_i32, %arg1 : i32, i32
  }
  func.func @transform_3(%arg0: i32, %arg1: i32, %arg2: i32) -> (i32, i32) {
    %c0_i32 = arith.constant 0 : i32
    %c0_i32_0 = arith.constant 0 : i32
    return %c0_i32, %arg1 : i32, i32
  }
  func.func @transform_4(%arg0: i32, %arg1: i32, %arg2: i32) -> (i32, i32) {
    %c0_i32 = arith.constant 0 : i32
    return %arg0, %arg1 : i32, i32
  }
}

</mosaic_0001>

<llo_original>
// kernel: tpu_custom_call.1
$region0: #{tpu_custom_call.1}
  #allocation0 [shape = 'u32[]', space=smem, size = 0x4, offset = 0x4, fixed_abs, tag = 'smem constant byte address 0x4 - core index']
  #allocation1 [shape = 'u32[144,128]{1,0:T(1,128)}', space=vmem, size = 0x12000, scoped, tag = 'internal scratch']
  #allocation2 [shape = 'f32[512,128]{1,0:T(8,128)}', space=vmem, size = 0x40000, scoped, tag = 'scratch operand']
  %s0 = inlined_call_operand.hbm [shape: bf16[512,128], index: 0, kind: input, shape index: {}]
  %s1 = inlined_call_operand.hbm [shape: bf16[128,128], index: 1, kind: input, shape index: {}]
  %s2 = inlined_call_operand.vmem [shape: f32[1,128], index: 2, kind: input, shape index: {}]
  %s3 = inlined_call_operand.vmem [shape: f32[1,128], index: 3, kind: input, shape index: {}]
  %s4 = inlined_call_operand.hbm [shape: bf16[512,128], index: 4, kind: output, shape index: {}]
  %s5 = sld [smem:[#allocation0]]
  $region42: #{tpu_custom_call.1} parent=0
    _
  %s7 = ssub.s32 1, %s5
  %s8 = scalar_select 0, %s7, %s5
  $region1: #{tpu_custom_call.1} parent=0
    #allocation3 [shape = 'u8[131072]{0}', space=vmem, size = 0x20000, scoped, tag = 'input window, operand 0, single buffered']
    #allocation4 [shape = 's32[1]{0}', space=sflag, size = 0x4, scoped, tag = 'scoped memory for tpu_custom_call.1']
    #allocation5 [shape = 's32[1]{0}', space=sflag, size = 0x4, scoped, tag = 'scoped memory for tpu_custom_call.1']
    #allocation6 [shape = 'u8[32768]{0}', space=vmem, size = 0x8000, scoped, tag = 'input window, operand 1, single buffered']
    #allocation7 [shape = 's32[1]{0}', space=sflag, size = 0x4, scoped, tag = 'scoped memory for tpu_custom_call.1']
    #allocation8 [shape = 'u8[131072]{0}', space=vmem, size = 0x20000, scoped, tag = 'output window, operand 0, single buffered']
    %9 = vsyncpa [#allocation4], 0
    %10 = vsyncpa [#allocation7], 0
    %11 = vsyncpa [#allocation5], 0
    // Predicated region
    $region2: #{tpu_custom_call.1} parent=1 // pred_check
      _
    $region3: #{tpu_custom_call.1} parent=1 // pred_check_branch
      %13 = sbr.rel (0) target = $region5
    $region4: #{tpu_custom_call.1} parent=1 // pred_region
      %s15 = ssub.s32 4096, 4096
      %16 = vsyncadd [#allocation4], %s15
      %s17 = sshll.u32 [#allocation3], 4
      %s18 = int_to_ptr.vmem [resolvable:$true] %s17
      %23 = dma.hbm_to_vmem [thread:$0]  %s0, 4096, %s18, [#allocation4], 64, 64, 4
    $region5: #{tpu_custom_call.1} parent=1 // pred_fallthru
      _
    // Predicated region
    $region6: #{tpu_custom_call.1} parent=1 // pred_check
      _
    $region7: #{tpu_custom_call.1} parent=1 // pred_check_branch
      %25 = sbr.rel (0) target = $region9
    $region8: #{tpu_custom_call.1} parent=1 // pred_region
      %s27 = ssub.s32 1024, 1024
      %28 = vsyncadd [#allocation7], %s27
      %s29 = sshll.u32 [#allocation6], 4
      %s30 = int_to_ptr.vmem [resolvable:$true] %s29
      %35 = dma.hbm_to_vmem [thread:$0]  %s1, 1024, %s30, [#allocation7], 64, 64, 4
    $region9: #{tpu_custom_call.1} parent=1 // pred_fallthru
      _
    // Predicated region
    $region10: #{tpu_custom_call.1} parent=1 // pred_check
      _
    $region11: #{tpu_custom_call.1} parent=1 // pred_check_branch
      %37 = sbr.rel (0) target = $region13
    $region12: #{tpu_custom_call.1} parent=1 // pred_region
      _
    $region13: #{tpu_custom_call.1} parent=1 // pred_fallthru
      _
    // Predicated region
    $region14: #{tpu_custom_call.1} parent=1 // pred_check
      _
    $region15: #{tpu_custom_call.1} parent=1 // pred_check_branch
      %39 = sbr.rel (0) target = $region17
    $region16: #{tpu_custom_call.1} parent=1 // pred_region
      _
    $region17: #{tpu_custom_call.1} parent=1 // pred_fallthru
      _
    // Predicated region
    $region18: #{tpu_custom_call.1} parent=1 // pred_check
      _
    $region19: #{tpu_custom_call.1} parent=1 // pred_check_branch
      %41 = sbr.rel (0) target = $region21
    $region20: #{tpu_custom_call.1} parent=1 // pred_region
      %42 = dma.done [#allocation4], 4096
    $region21: #{tpu_custom_call.1} parent=1 // pred_fallthru
      _
    // Predicated region
    $region22: #{tpu_custom_call.1} parent=1 // pred_check
      _
    $region23: #{tpu_custom_call.1} parent=1 // pred_check_branch
      %44 = sbr.rel (0) target = $region25
    $region24: #{tpu_custom_call.1} parent=1 // pred_region
      %45 = dma.done [#allocation7], 1024
    $region25: #{tpu_custom_call.1} parent=1 // pred_fallthru
      _
    %p47 = scmp.eq.s32.totalorder 0, 0
    // Predicated region
    $region26: #{tpu_custom_call.1} parent=1 // pred_check
      %p48 = pneg %p47
    $region27: #{tpu_custom_call.1} parent=1 // pred_check_branch
      %50 = sbr.rel (%p48) target = $region29
    $region28: #{tpu_custom_call.1} parent=1 // pred_region
      %51 = vst [vmem:[#allocation2] sm:$0xff] 0.0
      %52 = vst [vmem:[#allocation2 + $0x8] sm:$0xff] 0.0
      %53 = vst [vmem:[#allocation2 + $0x10] sm:$0xff] 0.0
      %54 = vst [vmem:[#allocation2 + $0x18] sm:$0xff] 0.0
      %55 = vst [vmem:[#allocation2 + $0x20] sm:$0xff] 0.0
      %56 = vst [vmem:[#allocation2 + $0x28] sm:$0xff] 0.0
      %57 = vst [vmem:[#allocation2 + $0x30] sm:$0xff] 0.0
      %58 = vst [vmem:[#allocation2 + $0x38] sm:$0xff] 0.0
      %59 = vst [vmem:[#allocation2 + $0x40] sm:$0xff] 0.0
      %60 = vst [vmem:[#allocation2 + $0x48] sm:$0xff] 0.0
      %61 = vst [vmem:[#allocation2 + $0x50] sm:$0xff] 0.0
      %62 = vst [vmem:[#allocation2 + $0x58] sm:$0xff] 0.0
      %63 = vst [vmem:[#allocation2 + $0x60] sm:$0xff] 0.0
      %64 = vst [vmem:[#allocation2 + $0x68] sm:$0xff] 0.0
      %65 = vst [vmem:[#allocation2 + $0x70] sm:$0xff] 0.0
      %66 = vst [vmem:[#allocation2 + $0x78] sm:$0xff] 0.0
      %67 = vst [vmem:[#allocation2 + $0x80] sm:$0xff] 0.0
      %68 = vst [vmem:[#allocation2 + $0x88] sm:$0xff] 0.0
      %69 = vst [vmem:[#allocation2 + $0x90] sm:$0xff] 0.0
      %70 = vst [vmem:[#allocation2 + $0x98] sm:$0xff] 0.0
      %71 = vst [vmem:[#allocation2 + $0xa0] sm:$0xff] 0.0
      %72 = vst [vmem:[#allocation2 + $0xa8] sm:$0xff] 0.0
      %73 = vst [vmem:[#allocation2 + $0xb0] sm:$0xff] 0.0
      %74 = vst [vmem:[#allocation2 + $0xb8] sm:$0xff] 0.0
      %75 = vst [vmem:[#allocation2 + $0xc0] sm:$0xff] 0.0
      %76 = vst [vmem:[#allocation2 + $0xc8] sm:$0xff] 0.0
      %77 = vst [vmem:[#allocation2 + $0xd0] sm:$0xff] 0.0
      %78 = vst [vmem:[#allocation2 + $0xd8] sm:$0xff] 0.0
      %79 = vst [vmem:[#allocation2 + $0xe0] sm:$0xff] 0.0
      %80 = vst [vmem:[#allocation2 + $0xe8] sm:$0xff] 0.0
      %81 = vst [vmem:[#allocation2 + $0xf0] sm:$0xff] 0.0
      %82 = vst [vmem:[#allocation2 + $0xf8] sm:$0xff] 0.0
      %83 = vst [vmem:[#allocation2 + $0x100] sm:$0xff] 0.0
      %84 = vst [vmem:[#allocation2 + $0x108] sm:$0xff] 0.0
      %85 = vst [vmem:[#allocation2 + $0x110] sm:$0xff] 0.0
      %86 = vst [vmem:[#allocation2 + $0x118] sm:$0xff] 0.0
      %87 = vst [vmem:[#allocation2 + $0x120] sm:$0xff] 0.0
      %88 = vst [vmem:[#allocation2 + $0x128] sm:$0xff] 0.0
      %89 = vst [vmem:[#allocation2 + $0x130] sm:$0xff] 0.0
      %90 = vst [vmem:[#allocation2 + $0x138] sm:$0xff] 0.0
      %91 = vst [vmem:[#allocation2 + $0x140] sm:$0xff] 0.0
      %92 = vst [vmem:[#allocation2 + $0x148] sm:$0xff] 0.0
      %93 = vst [vmem:[#allocation2 + $0x150] sm:$0xff] 0.0
      %94 = vst [vmem:[#allocation2 + $0x158] sm:$0xff] 0.0
      %95 = vst [vmem:[#allocation2 + $0x160] sm:$0xff] 0.0
      %96 = vst [vmem:[#allocation2 + $0x168] sm:$0xff] 0.0
      %97 = vst [vmem:[#allocation2 + $0x170] sm:$0xff] 0.0
      %98 = vst [vmem:[#allocation2 + $0x178] sm:$0xff] 0.0
      %99 = vst [vmem:[#allocation2 + $0x180] sm:$0xff] 0.0
      %100 = vst [vmem:[#allocation2 + $0x188] sm:$0xff] 0.0
      %101 = vst [vmem:[#allocation2 + $0x190] sm:$0xff] 0.0
      %102 = vst [vmem:[#allocation2 + $0x198] sm:$0xff] 0.0
      %103 = vst [vmem:[#allocation2 + $0x1a0] sm:$0xff] 0.0
      %104 = vst [vmem:[#allocation2 + $0x1a8] sm:$0xff] 0.0
      %105 = vst [vmem:[#allocation2 + $0x1b0] sm:$0xff] 0.0
      %106 = vst [vmem:[#allocation2 + $0x1b8] sm:$0xff] 0.0
      %107 = vst [vmem:[#allocation2 + $0x1c0] sm:$0xff] 0.0
      %108 = vst [vmem:[#allocation2 + $0x1c8] sm:$0xff] 0.0
      %109 = vst [vmem:[#allocation2 + $0x1d0] sm:$0xff] 0.0
      %110 = vst [vmem:[#allocation2 + $0x1d8] sm:$0xff] 0.0
      %111 = vst [vmem:[#allocation2 + $0x1e0] sm:$0xff] 0.0
      %112 = vst [vmem:[#allocation2 + $0x1e8] sm:$0xff] 0.0
      %113 = vst [vmem:[#allocation2 + $0x1f0] sm:$0xff] 0.0
      %114 = vst [vmem:[#allocation2 + $0x1f8] sm:$0xff] 0.0
    $region29: #{tpu_custom_call.1} parent=1 // pred_fallthru
      _
    %v115 = vld [vmem:[#allocation2] sm:$0xff]
    %v116 = vld [vmem:[#allocation2 + $0x8] sm:$0xff]
    %v117 = vld [vmem:[#allocation2 + $0x10] sm:$0xff]
    %v118 = vld [vmem:[#allocation2 + $0x18] sm:$0xff]
    %v119 = vld [vmem:[#allocation2 + $0x20] sm:$0xff]
    %v120 = vld [vmem:[#allocation2 + $0x28] sm:$0xff]
    %v121 = vld [vmem:[#allocation2 + $0x30] sm:$0xff]
    %v122 = vld [vmem:[#allocation2 + $0x38] sm:$0xff]
    %v123 = vld [vmem:[#allocation2 + $0x40] sm:$0xff]
    %v124 = vld [vmem:[#allocation2 + $0x48] sm:$0xff]
    %v125 = vld [vmem:[#allocation2 + $0x50] sm:$0xff]
    %v126 = vld [vmem:[#allocation2 + $0x58] sm:$0xff]
    %v127 = vld [vmem:[#allocation2 + $0x60] sm:$0xff]
    %v128 = vld [vmem:[#allocation2 + $0x68] sm:$0xff]
    %v129 = vld [vmem:[#allocation2 + $0x70] sm:$0xff]
    %v130 = vld [vmem:[#allocation2 + $0x78] sm:$0xff]
    %v131 = vld [vmem:[#allocation2 + $0x80] sm:$0xff]
    %v132 = vld [vmem:[#allocation2 + $0x88] sm:$0xff]
    %v133 = vld [vmem:[#allocation2 + $0x90] sm:$0xff]
    %v134 = vld [vmem:[#allocation2 + $0x98] sm:$0xff]
    %v135 = vld [vmem:[#allocation2 + $0xa0] sm:$0xff]
    %v136 = vld [vmem:[#allocation2 + $0xa8] sm:$0xff]
    %v137 = vld [vmem:[#allocation2 + $0xb0] sm:$0xff]
    %v138 = vld [vmem:[#allocation2 + $0xb8] sm:$0xff]
    %v139 = vld [vmem:[#allocation2 + $0xc0] sm:$0xff]
    %v140 = vld [vmem:[#allocation2 + $0xc8] sm:$0xff]
    %v141 = vld [vmem:[#allocation2 + $0xd0] sm:$0xff]
    %v142 = vld [vmem:[#allocation2 + $0xd8] sm:$0xff]
    %v143 = vld [vmem:[#allocation2 + $0xe0] sm:$0xff]
    %v144 = vld [vmem:[#allocation2 + $0xe8] sm:$0xff]
    %v145 = vld [vmem:[#allocation2 + $0xf0] sm:$0xff]
    %v146 = vld [vmem:[#allocation2 + $0xf8] sm:$0xff]
    %v147 = vld [vmem:[#allocation2 + $0x100] sm:$0xff]
    %v148 = vld [vmem:[#allocation2 + $0x108] sm:$0xff]
    %v149 = vld [vmem:[#allocation2 + $0x110] sm:$0xff]
    %v150 = vld [vmem:[#allocation2 + $0x118] sm:$0xff]
    %v151 = vld [vmem:[#allocation2 + $0x120] sm:$0xff]
    %v152 = vld [vmem:[#allocation2 + $0x128] sm:$0xff]
    %v153 = vld [vmem:[#allocation2 + $0x130] sm:$0xff]
    %v154 = vld [vmem:[#allocation2 + $0x138] sm:$0xff]
    %v155 = vld [vmem:[#allocation2 + $0x140] sm:$0xff]
    %v156 = vld [vmem:[#allocation2 + $0x148] sm:$0xff]
    %v157 = vld [vmem:[#allocation2 + $0x150] sm:$0xff]
    %v158 = vld [vmem:[#allocation2 + $0x158] sm:$0xff]
    %v159 = vld [vmem:[#allocation2 + $0x160] sm:$0xff]
    %v160 = vld [vmem:[#allocation2 + $0x168] sm:$0xff]
    %v161 = vld [vmem:[#allocation2 + $0x170] sm:$0xff]
    %v162 = vld [vmem:[#allocation2 + $0x178] sm:$0xff]
    %v163 = vld [vmem:[#allocation2 + $0x180] sm:$0xff]
    %v164 = vld [vmem:[#allocation2 + $0x188] sm:$0xff]
    %v165 = vld [vmem:[#allocation2 + $0x190] sm:$0xff]
    %v166 = vld [vmem:[#allocation2 + $0x198] sm:$0xff]
    %v167 = vld [vmem:[#allocation2 + $0x1a0] sm:$0xff]
    %v168 = vld [vmem:[#allocation2 + $0x1a8] sm:$0xff]
    %v169 = vld [vmem:[#allocation2 + $0x1b0] sm:$0xff]
    %v170 = vld [vmem:[#allocation2 + $0x1b8] sm:$0xff]
    %v171 = vld [vmem:[#allocation2 + $0x1c0] sm:$0xff]
    %v172 = vld [vmem:[#allocation2 + $0x1c8] sm:$0xff]
    %v173 = vld [vmem:[#allocation2 + $0x1d0] sm:$0xff]
    %v174 = vld [vmem:[#allocation2 + $0x1d8] sm:$0xff]
    %v175 = vld [vmem:[#allocation2 + $0x1e0] sm:$0xff]
    %v176 = vld [vmem:[#allocation2 + $0x1e8] sm:$0xff]
    %v177 = vld [vmem:[#allocation2 + $0x1f0] sm:$0xff]
    %v178 = vld [vmem:[#allocation2 + $0x1f8] sm:$0xff]
    %v179 = vld [vmem:[#allocation3] sm:$0xf]
    %v180 = vld [vmem:[#allocation3 + $0x4] sm:$0xf]
    %v181 = vld [vmem:[#allocation3 + $0x8] sm:$0xf]
    %v182 = vld [vmem:[#allocation3 + $0xc] sm:$0xf]
    %v183 = vld [vmem:[#allocation3 + $0x10] sm:$0xf]
    %v184 = vld [vmem:[#allocation3 + $0x14] sm:$0xf]
    %v185 = vld [vmem:[#allocation3 + $0x18] sm:$0xf]
    %v186 = vld [vmem:[#allocation3 + $0x1c] sm:$0xf]
    %v187 = vld [vmem:[#allocation3 + $0x20] sm:$0xf]
    %v188 = vld [vmem:[#allocation3 + $0x24] sm:$0xf]
    %v189 = vld [vmem:[#allocation3 + $0x28] sm:$0xf]
    %v190 = vld [vmem:[#allocation3 + $0x2c] sm:$0xf]
    %v191 = vld [vmem:[#allocation3 + $0x30] sm:$0xf]
    %v192 = vld [vmem:[#allocation3 + $0x34] sm:$0xf]
    %v193 = vld [vmem:[#allocation3 + $0x38] sm:$0xf]
    %v194 = vld [vmem:[#allocation3 + $0x3c] sm:$0xf]
    %v195 = vld [vmem:[#allocation3 + $0x40] sm:$0xf]
    %v196 = vld [vmem:[#allocation3 + $0x44] sm:$0xf]
    %v197 = vld [vmem:[#allocation3 + $0x48] sm:$0xf]
    %v198 = vld [vmem:[#allocation3 + $0x4c] sm:$0xf]
    %v199 = vld [vmem:[#allocation3 + $0x50] sm:$0xf]
    %v200 = vld [vmem:[#allocation3 + $0x54] sm:$0xf]
    %v201 = vld [vmem:[#allocation3 + $0x58] sm:$0xf]
    %v202 = vld [vmem:[#allocation3 + $0x5c] sm:$0xf]
    %v203 = vld [vmem:[#allocation3 + $0x60] sm:$0xf]
    %v204 = vld [vmem:[#allocation3 + $0x64] sm:$0xf]
    %v205 = vld [vmem:[#allocation3 + $0x68] sm:$0xf]
    %v206 = vld [vmem:[#allocation3 + $0x6c] sm:$0xf]
    %v207 = vld [vmem:[#allocation3 + $0x70] sm:$0xf]
    %v208 = vld [vmem:[#allocation3 + $0x74] sm:$0xf]
    %v209 = vld [vmem:[#allocation3 + $0x78] sm:$0xf]
    %v210 = vld [vmem:[#allocation3 + $0x7c] sm:$0xf]
    %v211 = vld [vmem:[#allocation3 + $0x80] sm:$0xf]
    %v212 = vld [vmem:[#allocation3 + $0x84] sm:$0xf]
    %v213 = vld [vmem:[#allocation3 + $0x88] sm:$0xf]
    %v214 = vld [vmem:[#allocation3 + $0x8c] sm:$0xf]
    %v215 = vld [vmem:[#allocation3 + $0x90] sm:$0xf]
    %v216 = vld [vmem:[#allocation3 + $0x94] sm:$0xf]
    %v217 = vld [vmem:[#allocation3 + $0x98] sm:$0xf]
    %v218 = vld [vmem:[#allocation3 + $0x9c] sm:$0xf]
    %v219 = vld [vmem:[#allocation3 + $0xa0] sm:$0xf]
    %v220 = vld [vmem:[#allocation3 + $0xa4] sm:$0xf]
    %v221 = vld [vmem:[#allocation3 + $0xa8] sm:$0xf]
    %v222 = vld [vmem:[#allocation3 + $0xac] sm:$0xf]
    %v223 = vld [vmem:[#allocation3 + $0xb0] sm:$0xf]
    %v224 = vld [vmem:[#allocation3 + $0xb4] sm:$0xf]
    %v225 = vld [vmem:[#allocation3 + $0xb8] sm:$0xf]
    %v226 = vld [vmem:[#allocation3 + $0xbc] sm:$0xf]
    %v227 = vld [vmem:[#allocation3 + $0xc0] sm:$0xf]
    %v228 = vld [vmem:[#allocation3 + $0xc4] sm:$0xf]
    %v229 = vld [vmem:[#allocation3 + $0xc8] sm:$0xf]
    %v230 = vld [vmem:[#allocation3 + $0xcc] sm:$0xf]
    %v231 = vld [vmem:[#allocation3 + $0xd0] sm:$0xf]
    %v232 = vld [vmem:[#allocation3 + $0xd4] sm:$0xf]
    %v233 = vld [vmem:[#allocation3 + $0xd8] sm:$0xf]
    %v234 = vld [vmem:[#allocation3 + $0xdc] sm:$0xf]
    %v235 = vld [vmem:[#allocation3 + $0xe0] sm:$0xf]
    %v236 = vld [vmem:[#allocation3 + $0xe4] sm:$0xf]
    %v237 = vld [vmem:[#allocation3 + $0xe8] sm:$0xf]
    %v238 = vld [vmem:[#allocation3 + $0xec] sm:$0xf]
    %v239 = vld [vmem:[#allocation3 + $0xf0] sm:$0xf]
    %v240 = vld [vmem:[#allocation3 + $0xf4] sm:$0xf]
    %v241 = vld [vmem:[#allocation3 + $0xf8] sm:$0xf]
    %v242 = vld [vmem:[#allocation3 + $0xfc] sm:$0xf]
    %v243 = vld [vmem:[#allocation6] sm:$0xf]
    %v244 = vld [vmem:[#allocation6 + $0x4] sm:$0xf]
    %v245 = vld [vmem:[#allocation6 + $0x8] sm:$0xf]
    %v246 = vld [vmem:[#allocation6 + $0xc] sm:$0xf]
    %v247 = vld [vmem:[#allocation6 + $0x10] sm:$0xf]
    %v248 = vld [vmem:[#allocation6 + $0x14] sm:$0xf]
    %v249 = vld [vmem:[#allocation6 + $0x18] sm:$0xf]
    %v250 = vld [vmem:[#allocation6 + $0x1c] sm:$0xf]
    %v251 = vld [vmem:[#allocation6 + $0x20] sm:$0xf]
    %v252 = vld [vmem:[#allocation6 + $0x24] sm:$0xf]
    %v253 = vld [vmem:[#allocation6 + $0x28] sm:$0xf]
    %v254 = vld [vmem:[#allocation6 + $0x2c] sm:$0xf]
    %v255 = vld [vmem:[#allocation6 + $0x30] sm:$0xf]
    %v256 = vld [vmem:[#allocation6 + $0x34] sm:$0xf]
    %v257 = vld [vmem:[#allocation6 + $0x38] sm:$0xf]
    %v258 = vld [vmem:[#allocation6 + $0x3c] sm:$0xf]
    %v323 = vunpack.c.l.b16 %v179
    %v324 = vunpack.c.l.b16 %v180
    %v325 = vunpack.c.l.b16 %v181
    %v326 = vunpack.c.l.b16 %v182
    %v327 = vunpack.c.l.b16 %v183
    %v328 = vunpack.c.l.b16 %v184
    %v329 = vunpack.c.l.b16 %v185
    %v330 = vunpack.c.l.b16 %v186
    %v331 = vunpack.c.l.b16 %v187
    %v332 = vunpack.c.l.b16 %v188
    %v333 = vunpack.c.l.b16 %v189
    %v334 = vunpack.c.l.b16 %v190
    %v335 = vunpack.c.l.b16 %v191
    %v336 = vunpack.c.l.b16 %v192
    %v337 = vunpack.c.l.b16 %v193
    %v338 = vunpack.c.l.b16 %v194
    %v339 = vunpack.c.l.b16 %v195
    %v340 = vunpack.c.l.b16 %v196
    %v341 = vunpack.c.l.b16 %v197
    %v342 = vunpack.c.l.b16 %v198
    %v343 = vunpack.c.l.b16 %v199
    %v344 = vunpack.c.l.b16 %v200
    %v345 = vunpack.c.l.b16 %v201
    %v346 = vunpack.c.l.b16 %v202
    %v347 = vunpack.c.l.b16 %v203
    %v348 = vunpack.c.l.b16 %v204
    %v349 = vunpack.c.l.b16 %v205
    %v350 = vunpack.c.l.b16 %v206
    %v351 = vunpack.c.l.b16 %v207
    %v352 = vunpack.c.l.b16 %v208
    %v353 = vunpack.c.l.b16 %v209
    %v354 = vunpack.c.l.b16 %v210
    %v355 = vunpack.c.l.b16 %v211
    %v356 = vunpack.c.l.b16 %v212
    %v357 = vunpack.c.l.b16 %v213
    %v358 = vunpack.c.l.b16 %v214
    %v359 = vunpack.c.l.b16 %v215
    %v360 = vunpack.c.l.b16 %v216
    %v361 = vunpack.c.l.b16 %v217
    %v362 = vunpack.c.l.b16 %v218
    %v363 = vunpack.c.l.b16 %v219
    %v364 = vunpack.c.l.b16 %v220
    %v365 = vunpack.c.l.b16 %v221
    %v366 = vunpack.c.l.b16 %v222
    %v367 = vunpack.c.l.b16 %v223
    %v368 = vunpack.c.l.b16 %v224
    %v369 = vunpack.c.l.b16 %v225
    %v370 = vunpack.c.l.b16 %v226
    %v371 = vunpack.c.l.b16 %v227
    %v372 = vunpack.c.l.b16 %v228
    %v373 = vunpack.c.l.b16 %v229
    %v374 = vunpack.c.l.b16 %v230
    %v375 = vunpack.c.l.b16 %v231
    %v376 = vunpack.c.l.b16 %v232
    %v377 = vunpack.c.l.b16 %v233
    %v378 = vunpack.c.l.b16 %v234
    %v379 = vunpack.c.l.b16 %v235
    %v380 = vunpack.c.l.b16 %v236
    %v381 = vunpack.c.l.b16 %v237
    %v382 = vunpack.c.l.b16 %v238
    %v383 = vunpack.c.l.b16 %v239
    %v384 = vunpack.c.l.b16 %v240
    %v385 = vunpack.c.l.b16 %v241
    %v386 = vunpack.c.l.b16 %v242
    %v387 = vpack.c.b16 %v324, %v323
    %v388 = vpack.c.b16 %v326, %v325
    %v389 = vpack.c.b16 %v328, %v327
    %v390 = vpack.c.b16 %v330, %v329
    %v391 = vpack.c.b16 %v332, %v331
    %v392 = vpack.c.b16 %v334, %v333
    %v393 = vpack.c.b16 %v336, %v335
    %v394 = vpack.c.b16 %v338, %v337
    %v395 = vpack.c.b16 %v340, %v339
    %v396 = vpack.c.b16 %v342, %v341
    %v397 = vpack.c.b16 %v344, %v343
    %v398 = vpack.c.b16 %v346, %v345
    %v399 = vpack.c.b16 %v348, %v347
    %v400 = vpack.c.b16 %v350, %v349
    %v401 = vpack.c.b16 %v352, %v351
    %v402 = vpack.c.b16 %v354, %v353
    %v403 = vpack.c.b16 %v356, %v355
    %v404 = vpack.c.b16 %v358, %v357
    %v405 = vpack.c.b16 %v360, %v359
    %v406 = vpack.c.b16 %v362, %v361
    %v407 = vpack.c.b16 %v364, %v363
    %v408 = vpack.c.b16 %v366, %v365
    %v409 = vpack.c.b16 %v368, %v367
    %v410 = vpack.c.b16 %v370, %v369
    %v411 = vpack.c.b16 %v372, %v371
    %v412 = vpack.c.b16 %v374, %v373
    %v413 = vpack.c.b16 %v376, %v375
    %v414 = vpack.c.b16 %v378, %v377
    %v415 = vpack.c.b16 %v380, %v379
    %v416 = vpack.c.b16 %v382, %v381
    %v417 = vpack.c.b16 %v384, %v383
    %v418 = vpack.c.b16 %v386, %v385
    %v467 = vunpack.c.l.b16 %v243
    %v468 = vunpack.c.l.b16 %v244
    %v469 = vunpack.c.l.b16 %v245
    %v470 = vunpack.c.l.b16 %v246
    %v471 = vunpack.c.l.b16 %v247
    %v472 = vunpack.c.l.b16 %v248
    %v473 = vunpack.c.l.b16 %v249
    %v474 = vunpack.c.l.b16 %v250
    %v475 = vunpack.c.l.b16 %v251
    %v476 = vunpack.c.l.b16 %v252
    %v477 = vunpack.c.l.b16 %v253
    %v478 = vunpack.c.l.b16 %v254
    %v479 = vunpack.c.l.b16 %v255
    %v480 = vunpack.c.l.b16 %v256
    %v481 = vunpack.c.l.b16 %v257
    %v482 = vunpack.c.l.b16 %v258
    %v483 = vpack.c.b16 %v468, %v467
    %v484 = vpack.c.b16 %v470, %v469
    %v485 = vpack.c.b16 %v472, %v471
    %v486 = vpack.c.b16 %v474, %v473
    %v487 = vpack.c.b16 %v476, %v475
    %v488 = vpack.c.b16 %v478, %v477
    %v489 = vpack.c.b16 %v480, %v479
    %v490 = vpack.c.b16 %v482, %v481
    %499 = vmatprep.subr.bf16.mxu0 0
    %500 = vmatpush1.bf16.msra.mxu0 %v490
    %501 = vmatprep.subr.bf16.mxu0 0
    %502 = vmatpush1.bf16.msra.mxu0 %v489
    %503 = vmatprep.subr.bf16.mxu0 0
    %504 = vmatpush1.bf16.msra.mxu0 %v488
    %505 = vmatprep.subr.bf16.mxu0 0
    %506 = vmatpush1.bf16.msra.mxu0 %v487
    %507 = vmatprep.subr.bf16.mxu0 0
    %508 = vmatpush1.bf16.msra.mxu0 %v486
    %509 = vmatprep.subr.bf16.mxu0 0
    %510 = vmatpush1.bf16.msra.mxu0 %v485
    %511 = vmatprep.subr.bf16.mxu0 0
    %512 = vmatpush1.bf16.msra.mxu0 %v484
    %513 = vmatprep.subr.bf16.mxu0 0
    %514 = vmatpush1.bf16.msra.mxu0 %v483
    %515 = vmatprep.subr.bf16.mxu0 0
    %516 = vmatpush2.bf16.msra.mxu0 0
    %517 = vmatprep.subr.bf16.mxu0 0
    %518 = vmatpush2.bf16.msra.mxu0 0
    %519 = vmatprep.subr.bf16.mxu0 0
    %520 = vmatpush2.bf16.msra.mxu0 0
    %521 = vmatprep.subr.bf16.mxu0 0
    %522 = vmatpush2.bf16.msra.mxu0 0
    %523 = vmatprep.subr.bf16.mxu0 0
    %524 = vmatpush2.bf16.msra.mxu0 0
    %525 = vmatprep.subr.bf16.mxu0 0
    %526 = vmatpush2.bf16.msra.mxu0 0
    %527 = vmatprep.subr.bf16.mxu0 0
    %528 = vmatpush2.bf16.msra.mxu0 0
    %529 = vmatprep.subr.bf16.mxu0 0
    %530 = vmatpush2.bf16.msra.mxu0 0
    %531 = vmatprep.mubr.bf16.mxu0 0
    %532 = vmatmul.mubr.bf16.gmra.mxu0 %v387
    %v533 = vpop.f32.mrf.mxu0
    %v534 = vadd.f32 0.0, %v533
    %v535 = vpop.f32.mrf.mxu0
    %v536 = vpop.f32.mrf.mxu0
    %v537 = vadd.f32 0.0, %v536
    %v538 = vpop.f32.mrf.mxu0
    %539 = vmatprep.mubr.bf16.mxu0 0
    %540 = vmatmul.mubr.bf16.gmra.mxu0 %v388
    %v541 = vpop.f32.mrf.mxu0
    %v542 = vadd.f32 0.0, %v541
    %v543 = vpop.f32.mrf.mxu0
    %v544 = vpop.f32.mrf.mxu0
    %v545 = vadd.f32 0.0, %v544
    %v546 = vpop.f32.mrf.mxu0
    %547 = vmatprep.mubr.bf16.mxu0 0
    %548 = vmatmul.mubr.bf16.gmra.mxu0 %v389
    %v549 = vpop.f32.mrf.mxu0
    %v550 = vadd.f32 0.0, %v549
    %v551 = vpop.f32.mrf.mxu0
    %v552 = vpop.f32.mrf.mxu0
    %v553 = vadd.f32 0.0, %v552
    %v554 = vpop.f32.mrf.mxu0
    %555 = vmatprep.mubr.bf16.mxu0 0
    %556 = vmatmul.mubr.bf16.gmra.mxu0 %v390
    %v557 = vpop.f32.mrf.mxu0
    %v558 = vadd.f32 0.0, %v557
    %v559 = vpop.f32.mrf.mxu0
    %v560 = vpop.f32.mrf.mxu0
    %v561 = vadd.f32 0.0, %v560
    %v562 = vpop.f32.mrf.mxu0
    %563 = vmatprep.mubr.bf16.mxu0 0
    %564 = vmatmul.mubr.bf16.gmra.mxu0 %v391
    %v565 = vpop.f32.mrf.mxu0
    %v566 = vadd.f32 0.0, %v565
    %v567 = vpop.f32.mrf.mxu0
    %v568 = vpop.f32.mrf.mxu0
    %v569 = vadd.f32 0.0, %v568
    %v570 = vpop.f32.mrf.mxu0
    %571 = vmatprep.mubr.bf16.mxu0 0
    %572 = vmatmul.mubr.bf16.gmra.mxu0 %v392
    %v573 = vpop.f32.mrf.mxu0
    %v574 = vadd.f32 0.0, %v573
    %v575 = vpop.f32.mrf.mxu0
    %v576 = vpop.f32.mrf.mxu0
    %v577 = vadd.f32 0.0, %v576
    %v578 = vpop.f32.mrf.mxu0
    %579 = vmatprep.mubr.bf16.mxu0 0
    %580 = vmatmul.mubr.bf16.gmra.mxu0 %v393
    %v581 = vpop.f32.mrf.mxu0
    %v582 = vadd.f32 0.0, %v581
    %v583 = vpop.f32.mrf.mxu0
    %v584 = vpop.f32.mrf.mxu0
    %v585 = vadd.f32 0.0, %v584
    %v586 = vpop.f32.mrf.mxu0
    %587 = vmatprep.mubr.bf16.mxu0 0
    %588 = vmatmul.mubr.bf16.gmra.mxu0 %v394
    %v589 = vpop.f32.mrf.mxu0
    %v590 = vadd.f32 0.0, %v589
    %v591 = vpop.f32.mrf.mxu0
    %v592 = vpop.f32.mrf.mxu0
    %v593 = vadd.f32 0.0, %v592
    %v594 = vpop.f32.mrf.mxu0
    %595 = vmatprep.mubr.bf16.mxu0 0
    %596 = vmatmul.mubr.bf16.gmra.mxu0 %v395
    %v597 = vpop.f32.mrf.mxu0
    %v598 = vadd.f32 0.0, %v597
    %v599 = vpop.f32.mrf.mxu0
    %v600 = vpop.f32.mrf.mxu0
    %v601 = vadd.f32 0.0, %v600
    %v602 = vpop.f32.mrf.mxu0
    %603 = vmatprep.mubr.bf16.mxu0 0
    %604 = vmatmul.mubr.bf16.gmra.mxu0 %v396
    %v605 = vpop.f32.mrf.mxu0
    %v606 = vadd.f32 0.0, %v605
    %v607 = vpop.f32.mrf.mxu0
    %v608 = vpop.f32.mrf.mxu0
    %v609 = vadd.f32 0.0, %v608
    %v610 = vpop.f32.mrf.mxu0
    %611 = vmatprep.mubr.bf16.mxu0 0
    %612 = vmatmul.mubr.bf16.gmra.mxu0 %v397
    %v613 = vpop.f32.mrf.mxu0
    %v614 = vadd.f32 0.0, %v613
    %v615 = vpop.f32.mrf.mxu0
    %v616 = vpop.f32.mrf.mxu0
    %v617 = vadd.f32 0.0, %v616
    %v618 = vpop.f32.mrf.mxu0
    %619 = vmatprep.mubr.bf16.mxu0 0
    %620 = vmatmul.mubr.bf16.gmra.mxu0 %v398
    %v621 = vpop.f32.mrf.mxu0
    %v622 = vadd.f32 0.0, %v621
    %v623 = vpop.f32.mrf.mxu0
    %v624 = vpop.f32.mrf.mxu0
    %v625 = vadd.f32 0.0, %v624
    %v626 = vpop.f32.mrf.mxu0
    %627 = vmatprep.mubr.bf16.mxu0 0
    %628 = vmatmul.mubr.bf16.gmra.mxu0 %v399
    %v629 = vpop.f32.mrf.mxu0
    %v630 = vadd.f32 0.0, %v629
    %v631 = vpop.f32.mrf.mxu0
    %v632 = vpop.f32.mrf.mxu0
    %v633 = vadd.f32 0.0, %v632
    %v634 = vpop.f32.mrf.mxu0
    %635 = vmatprep.mubr.bf16.mxu0 0
    %636 = vmatmul.mubr.bf16.gmra.mxu0 %v400
    %v637 = vpop.f32.mrf.mxu0
    %v638 = vadd.f32 0.0, %v637
    %v639 = vpop.f32.mrf.mxu0
    %v640 = vpop.f32.mrf.mxu0
    %v641 = vadd.f32 0.0, %v640
    %v642 = vpop.f32.mrf.mxu0
    %643 = vmatprep.mubr.bf16.mxu0 0
    %644 = vmatmul.mubr.bf16.gmra.mxu0 %v401
    %v645 = vpop.f32.mrf.mxu0
    %v646 = vadd.f32 0.0, %v645
    %v647 = vpop.f32.mrf.mxu0
    %v648 = vpop.f32.mrf.mxu0
    %v649 = vadd.f32 0.0, %v648
    %v650 = vpop.f32.mrf.mxu0
    %651 = vmatprep.mubr.bf16.mxu0 0
    %652 = vmatmul.mubr.bf16.gmra.mxu0 %v402
    %v653 = vpop.f32.mrf.mxu0
    %v654 = vadd.f32 0.0, %v653
    %v655 = vpop.f32.mrf.mxu0
    %v656 = vpop.f32.mrf.mxu0
    %v657 = vadd.f32 0.0, %v656
    %v658 = vpop.f32.mrf.mxu0
    %659 = vmatprep.mubr.bf16.mxu0 0
    %660 = vmatmul.mubr.bf16.gmra.mxu0 %v403
    %v661 = vpop.f32.mrf.mxu0
    %v662 = vadd.f32 0.0, %v661
    %v663 = vpop.f32.mrf.mxu0
    %v664 = vpop.f32.mrf.mxu0
    %v665 = vadd.f32 0.0, %v664
    %v666 = vpop.f32.mrf.mxu0
    %667 = vmatprep.mubr.bf16.mxu0 0
    %668 = vmatmul.mubr.bf16.gmra.mxu0 %v404
    %v669 = vpop.f32.mrf.mxu0
    %v670 = vadd.f32 0.0, %v669
    %v671 = vpop.f32.mrf.mxu0
    %v672 = vpop.f32.mrf.mxu0
    %v673 = vadd.f32 0.0, %v672
    %v674 = vpop.f32.mrf.mxu0
    %675 = vmatprep.mubr.bf16.mxu0 0
    %676 = vmatmul.mubr.bf16.gmra.mxu0 %v405
    %v677 = vpop.f32.mrf.mxu0
    %v678 = vadd.f32 0.0, %v677
    %v679 = vpop.f32.mrf.mxu0
    %v680 = vpop.f32.mrf.mxu0
    %v681 = vadd.f32 0.0, %v680
    %v682 = vpop.f32.mrf.mxu0
    %683 = vmatprep.mubr.bf16.mxu0 0
    %684 = vmatmul.mubr.bf16.gmra.mxu0 %v406
    %v685 = vpop.f32.mrf.mxu0
    %v686 = vadd.f32 0.0, %v685
    %v687 = vpop.f32.mrf.mxu0
    %v688 = vpop.f32.mrf.mxu0
    %v689 = vadd.f32 0.0, %v688
    %v690 = vpop.f32.mrf.mxu0
    %691 = vmatprep.mubr.bf16.mxu0 0
    %692 = vmatmul.mubr.bf16.gmra.mxu0 %v407
    %v693 = vpop.f32.mrf.mxu0
    %v694 = vadd.f32 0.0, %v693
    %v695 = vpop.f32.mrf.mxu0
    %v696 = vpop.f32.mrf.mxu0
    %v697 = vadd.f32 0.0, %v696
    %v698 = vpop.f32.mrf.mxu0
    %699 = vmatprep.mubr.bf16.mxu0 0
    %700 = vmatmul.mubr.bf16.gmra.mxu0 %v408
    %v701 = vpop.f32.mrf.mxu0
    %v702 = vadd.f32 0.0, %v701
    %v703 = vpop.f32.mrf.mxu0
    %v704 = vpop.f32.mrf.mxu0
    %v705 = vadd.f32 0.0, %v704
    %v706 = vpop.f32.mrf.mxu0
    %707 = vmatprep.mubr.bf16.mxu0 0
    %708 = vmatmul.mubr.bf16.gmra.mxu0 %v409
    %v709 = vpop.f32.mrf.mxu0
    %v710 = vadd.f32 0.0, %v709
    %v711 = vpop.f32.mrf.mxu0
    %v712 = vpop.f32.mrf.mxu0
    %v713 = vadd.f32 0.0, %v712
    %v714 = vpop.f32.mrf.mxu0
    %715 = vmatprep.mubr.bf16.mxu0 0
    %716 = vmatmul.mubr.bf16.gmra.mxu0 %v410
    %v717 = vpop.f32.mrf.mxu0
    %v718 = vadd.f32 0.0, %v717
    %v719 = vpop.f32.mrf.mxu0
    %v720 = vpop.f32.mrf.mxu0
    %v721 = vadd.f32 0.0, %v720
    %v722 = vpop.f32.mrf.mxu0
    %723 = vmatprep.mubr.bf16.mxu0 0
    %724 = vmatmul.mubr.bf16.gmra.mxu0 %v411
    %v725 = vpop.f32.mrf.mxu0
    %v726 = vadd.f32 0.0, %v725
    %v727 = vpop.f32.mrf.mxu0
    %v728 = vpop.f32.mrf.mxu0
    %v729 = vadd.f32 0.0, %v728
    %v730 = vpop.f32.mrf.mxu0
    %731 = vmatprep.mubr.bf16.mxu0 0
    %732 = vmatmul.mubr.bf16.gmra.mxu0 %v412
    %v733 = vpop.f32.mrf.mxu0
    %v734 = vadd.f32 0.0, %v733
    %v735 = vpop.f32.mrf.mxu0
    %v736 = vpop.f32.mrf.mxu0
    %v737 = vadd.f32 0.0, %v736
    %v738 = vpop.f32.mrf.mxu0
    %739 = vmatprep.mubr.bf16.mxu0 0
    %740 = vmatmul.mubr.bf16.gmra.mxu0 %v413
    %v741 = vpop.f32.mrf.mxu0
    %v742 = vadd.f32 0.0, %v741
    %v743 = vpop.f32.mrf.mxu0
    %v744 = vpop.f32.mrf.mxu0
    %v745 = vadd.f32 0.0, %v744
    %v746 = vpop.f32.mrf.mxu0
    %747 = vmatprep.mubr.bf16.mxu0 0
    %748 = vmatmul.mubr.bf16.gmra.mxu0 %v414
    %v749 = vpop.f32.mrf.mxu0
    %v750 = vadd.f32 0.0, %v749
    %v751 = vpop.f32.mrf.mxu0
    %v752 = vpop.f32.mrf.mxu0
    %v753 = vadd.f32 0.0, %v752
    %v754 = vpop.f32.mrf.mxu0
    %755 = vmatprep.mubr.bf16.mxu0 0
    %756 = vmatmul.mubr.bf16.gmra.mxu0 %v415
    %v757 = vpop.f32.mrf.mxu0
    %v758 = vadd.f32 0.0, %v757
    %v759 = vpop.f32.mrf.mxu0
    %v760 = vpop.f32.mrf.mxu0
    %v761 = vadd.f32 0.0, %v760
    %v762 = vpop.f32.mrf.mxu0
    %763 = vmatprep.mubr.bf16.mxu0 0
    %764 = vmatmul.mubr.bf16.gmra.mxu0 %v416
    %v765 = vpop.f32.mrf.mxu0
    %v766 = vadd.f32 0.0, %v765
    %v767 = vpop.f32.mrf.mxu0
    %v768 = vpop.f32.mrf.mxu0
    %v769 = vadd.f32 0.0, %v768
    %v770 = vpop.f32.mrf.mxu0
    %771 = vmatprep.mubr.bf16.mxu0 0
    %772 = vmatmul.mubr.bf16.gmra.mxu0 %v417
    %v773 = vpop.f32.mrf.mxu0
    %v774 = vadd.f32 0.0, %v773
    %v775 = vpop.f32.mrf.mxu0
    %v776 = vpop.f32.mrf.mxu0
    %v777 = vadd.f32 0.0, %v776
    %v778 = vpop.f32.mrf.mxu0
    %779 = vmatprep.mubr.bf16.mxu0 0
    %780 = vmatmul.mubr.bf16.gmra.mxu0 %v418
    %v781 = vpop.f32.mrf.mxu0
    %v782 = vadd.f32 0.0, %v781
    %v783 = vpop.f32.mrf.mxu0
    %v784 = vpop.f32.mrf.mxu0
    %v785 = vadd.f32 0.0, %v784
    %v786 = vpop.f32.mrf.mxu0
    %787 = vdwg.mxu0
    %v788 = vadd.f32 %v115, %v534
    %v789 = vadd.f32 %v116, %v537
    %v790 = vadd.f32 %v117, %v542
    %v791 = vadd.f32 %v118, %v545
    %v792 = vadd.f32 %v119, %v550
    %v793 = vadd.f32 %v120, %v553
    %v794 = vadd.f32 %v121, %v558
    %v795 = vadd.f32 %v122, %v561
    %v796 = vadd.f32 %v123, %v566
    %v797 = vadd.f32 %v124, %v569
    %v798 = vadd.f32 %v125, %v574
    %v799 = vadd.f32 %v126, %v577
    %v800 = vadd.f32 %v127, %v582
    %v801 = vadd.f32 %v128, %v585
    %v802 = vadd.f32 %v129, %v590
    %v803 = vadd.f32 %v130, %v593
    %v804 = vadd.f32 %v131, %v598
    %v805 = vadd.f32 %v132, %v601
    %v806 = vadd.f32 %v133, %v606
    %v807 = vadd.f32 %v134, %v609
    %v808 = vadd.f32 %v135, %v614
    %v809 = vadd.f32 %v136, %v617
    %v810 = vadd.f32 %v137, %v622
    %v811 = vadd.f32 %v138, %v625
    %v812 = vadd.f32 %v139, %v630
    %v813 = vadd.f32 %v140, %v633
    %v814 = vadd.f32 %v141, %v638
    %v815 = vadd.f32 %v142, %v641
    %v816 = vadd.f32 %v143, %v646
    %v817 = vadd.f32 %v144, %v649
    %v818 = vadd.f32 %v145, %v654
    %v819 = vadd.f32 %v146, %v657
    %v820 = vadd.f32 %v147, %v662
    %v821 = vadd.f32 %v148, %v665
    %v822 = vadd.f32 %v149, %v670
    %v823 = vadd.f32 %v150, %v673
    %v824 = vadd.f32 %v151, %v678
    %v825 = vadd.f32 %v152, %v681
    %v826 = vadd.f32 %v153, %v686
    %v827 = vadd.f32 %v154, %v689
    %v828 = vadd.f32 %v155, %v694
    %v829 = vadd.f32 %v156, %v697
    %v830 = vadd.f32 %v157, %v702
    %v831 = vadd.f32 %v158, %v705
    %v832 = vadd.f32 %v159, %v710
    %v833 = vadd.f32 %v160, %v713
    %v834 = vadd.f32 %v161, %v718
    %v835 = vadd.f32 %v162, %v721
    %v836 = vadd.f32 %v163, %v726
    %v837 = vadd.f32 %v164, %v729
    %v838 = vadd.f32 %v165, %v734
    %v839 = vadd.f32 %v166, %v737
    %v840 = vadd.f32 %v167, %v742
    %v841 = vadd.f32 %v168, %v745
    %v842 = vadd.f32 %v169, %v750
    %v843 = vadd.f32 %v170, %v753
    %v844 = vadd.f32 %v171, %v758
    %v845 = vadd.f32 %v172, %v761
    %v846 = vadd.f32 %v173, %v766
    %v847 = vadd.f32 %v174, %v769
    %v848 = vadd.f32 %v175, %v774
    %v849 = vadd.f32 %v176, %v777
    %v850 = vadd.f32 %v177, %v782
    %v851 = vadd.f32 %v178, %v785
    %852 = vst [vmem:[#allocation2] sm:$0xff] %v788
    %853 = vst [vmem:[#allocation2 + $0x8] sm:$0xff] %v789
    %854 = vst [vmem:[#allocation2 + $0x10] sm:$0xff] %v790
    %855 = vst [vmem:[#allocation2 + $0x18] sm:$0xff] %v791
    %856 = vst [vmem:[#allocation2 + $0x20] sm:$0xff] %v792
    %857 = vst [vmem:[#allocation2 + $0x28] sm:$0xff] %v793
    %858 = vst [vmem:[#allocation2 + $0x30] sm:$0xff] %v794
    %859 = vst [vmem:[#allocation2 + $0x38] sm:$0xff] %v795
    %860 = vst [vmem:[#allocation2 + $0x40] sm:$0xff] %v796
    %861 = vst [vmem:[#allocation2 + $0x48] sm:$0xff] %v797
    %862 = vst [vmem:[#allocation2 + $0x50] sm:$0xff] %v798
    %863 = vst [vmem:[#allocation2 + $0x58] sm:$0xff] %v799
    %864 = vst [vmem:[#allocation2 + $0x60] sm:$0xff] %v800
    %865 = vst [vmem:[#allocation2 + $0x68] sm:$0xff] %v801
    %866 = vst [vmem:[#allocation2 + $0x70] sm:$0xff] %v802
    %867 = vst [vmem:[#allocation2 + $0x78] sm:$0xff] %v803
    %868 = vst [vmem:[#allocation2 + $0x80] sm:$0xff] %v804
    %869 = vst [vmem:[#allocation2 + $0x88] sm:$0xff] %v805
    %870 = vst [vmem:[#allocation2 + $0x90] sm:$0xff] %v806
    %871 = vst [vmem:[#allocation2 + $0x98] sm:$0xff] %v807
    %872 = vst [vmem:[#allocation2 + $0xa0] sm:$0xff] %v808
    %873 = vst [vmem:[#allocation2 + $0xa8] sm:$0xff] %v809
    %874 = vst [vmem:[#allocation2 + $0xb0] sm:$0xff] %v810
    %875 = vst [vmem:[#allocation2 + $0xb8] sm:$0xff] %v811
    %876 = vst [vmem:[#allocation2 + $0xc0] sm:$0xff] %v812
    %877 = vst [vmem:[#allocation2 + $0xc8] sm:$0xff] %v813
    %878 = vst [vmem:[#allocation2 + $0xd0] sm:$0xff] %v814
    %879 = vst [vmem:[#allocation2 + $0xd8] sm:$0xff] %v815
    %880 = vst [vmem:[#allocation2 + $0xe0] sm:$0xff] %v816
    %881 = vst [vmem:[#allocation2 + $0xe8] sm:$0xff] %v817
    %882 = vst [vmem:[#allocation2 + $0xf0] sm:$0xff] %v818
    %883 = vst [vmem:[#allocation2 + $0xf8] sm:$0xff] %v819
    %884 = vst [vmem:[#allocation2 + $0x100] sm:$0xff] %v820
    %885 = vst [vmem:[#allocation2 + $0x108] sm:$0xff] %v821
    %886 = vst [vmem:[#allocation2 + $0x110] sm:$0xff] %v822
    %887 = vst [vmem:[#allocation2 + $0x118] sm:$0xff] %v823
    %888 = vst [vmem:[#allocation2 + $0x120] sm:$0xff] %v824
    %889 = vst [vmem:[#allocation2 + $0x128] sm:$0xff] %v825
    %890 = vst [vmem:[#allocation2 + $0x130] sm:$0xff] %v826
    %891 = vst [vmem:[#allocation2 + $0x138] sm:$0xff] %v827
    %892 = vst [vmem:[#allocation2 + $0x140] sm:$0xff] %v828
    %893 = vst [vmem:[#allocation2 + $0x148] sm:$0xff] %v829
    %894 = vst [vmem:[#allocation2 + $0x150] sm:$0xff] %v830
    %895 = vst [vmem:[#allocation2 + $0x158] sm:$0xff] %v831
    %896 = vst [vmem:[#allocation2 + $0x160] sm:$0xff] %v832
    %897 = vst [vmem:[#allocation2 + $0x168] sm:$0xff] %v833
    %898 = vst [vmem:[#allocation2 + $0x170] sm:$0xff] %v834
    %899 = vst [vmem:[#allocation2 + $0x178] sm:$0xff] %v835
    %900 = vst [vmem:[#allocation2 + $0x180] sm:$0xff] %v836
    %901 = vst [vmem:[#allocation2 + $0x188] sm:$0xff] %v837
    %902 = vst [vmem:[#allocation2 + $0x190] sm:$0xff] %v838
    %903 = vst [vmem:[#allocation2 + $0x198] sm:$0xff] %v839
    %904 = vst [vmem:[#allocation2 + $0x1a0] sm:$0xff] %v840
    %905 = vst [vmem:[#allocation2 + $0x1a8] sm:$0xff] %v841
    %906 = vst [vmem:[#allocation2 + $0x1b0] sm:$0xff] %v842
    %907 = vst [vmem:[#allocation2 + $0x1b8] sm:$0xff] %v843
    %908 = vst [vmem:[#allocation2 + $0x1c0] sm:$0xff] %v844
    %909 = vst [vmem:[#allocation2 + $0x1c8] sm:$0xff] %v845
    %910 = vst [vmem:[#allocation2 + $0x1d0] sm:$0xff] %v846
    %911 = vst [vmem:[#allocation2 + $0x1d8] sm:$0xff] %v847
    %912 = vst [vmem:[#allocation2 + $0x1e0] sm:$0xff] %v848
    %913 = vst [vmem:[#allocation2 + $0x1e8] sm:$0xff] %v849
    %914 = vst [vmem:[#allocation2 + $0x1f0] sm:$0xff] %v850
    %915 = vst [vmem:[#allocation2 + $0x1f8] sm:$0xff] %v851
    // Predicated region
    $region30: #{tpu_custom_call.1} parent=1 // pred_check
      %p916 = pneg %p47
    $region31: #{tpu_custom_call.1} parent=1 // pred_check_branch
      %918 = sbr.rel (%p916) target = $region33
    $region32: #{tpu_custom_call.1} parent=1 // pred_region
      %v919 = vld [vmem:[#allocation2] sm:$0xff]
      %v920 = vld [vmem:[#allocation2 + $0x8] sm:$0xff]
      %v921 = vld [vmem:[#allocation2 + $0x10] sm:$0xff]
      %v922 = vld [vmem:[#allocation2 + $0x18] sm:$0xff]
      %v923 = vld [vmem:[#allocation2 + $0x20] sm:$0xff]
      %v924 = vld [vmem:[#allocation2 + $0x28] sm:$0xff]
      %v925 = vld [vmem:[#allocation2 + $0x30] sm:$0xff]
      %v926 = vld [vmem:[#allocation2 + $0x38] sm:$0xff]
      %v927 = vld [vmem:[#allocation2 + $0x40] sm:$0xff]
      %v928 = vld [vmem:[#allocation2 + $0x48] sm:$0xff]
      %v929 = vld [vmem:[#allocation2 + $0x50] sm:$0xff]
      %v930 = vld [vmem:[#allocation2 + $0x58] sm:$0xff]
      %v931 = vld [vmem:[#allocation2 + $0x60] sm:$0xff]
      %v932 = vld [vmem:[#allocation2 + $0x68] sm:$0xff]
      %v933 = vld [vmem:[#allocation2 + $0x70] sm:$0xff]
      %v934 = vld [vmem:[#allocation2 + $0x78] sm:$0xff]
      %v935 = vld [vmem:[#allocation2 + $0x80] sm:$0xff]
      %v936 = vld [vmem:[#allocation2 + $0x88] sm:$0xff]
      %v937 = vld [vmem:[#allocation2 + $0x90] sm:$0xff]
      %v938 = vld [vmem:[#allocation2 + $0x98] sm:$0xff]
      %v939 = vld [vmem:[#allocation2 + $0xa0] sm:$0xff]
      %v940 = vld [vmem:[#allocation2 + $0xa8] sm:$0xff]
      %v941 = vld [vmem:[#allocation2 + $0xb0] sm:$0xff]
      %v942 = vld [vmem:[#allocation2 + $0xb8] sm:$0xff]
      %v943 = vld [vmem:[#allocation2 + $0xc0] sm:$0xff]
      %v944 = vld [vmem:[#allocation2 + $0xc8] sm:$0xff]
      %v945 = vld [vmem:[#allocation2 + $0xd0] sm:$0xff]
      %v946 = vld [vmem:[#allocation2 + $0xd8] sm:$0xff]
      %v947 = vld [vmem:[#allocation2 + $0xe0] sm:$0xff]
      %v948 = vld [vmem:[#allocation2 + $0xe8] sm:$0xff]
      %v949 = vld [vmem:[#allocation2 + $0xf0] sm:$0xff]
      %v950 = vld [vmem:[#allocation2 + $0xf8] sm:$0xff]
      %v951 = vld [vmem:[#allocation2 + $0x100] sm:$0xff]
      %v952 = vld [vmem:[#allocation2 + $0x108] sm:$0xff]
      %v953 = vld [vmem:[#allocation2 + $0x110] sm:$0xff]
      %v954 = vld [vmem:[#allocation2 + $0x118] sm:$0xff]
      %v955 = vld [vmem:[#allocation2 + $0x120] sm:$0xff]
      %v956 = vld [vmem:[#allocation2 + $0x128] sm:$0xff]
      %v957 = vld [vmem:[#allocation2 + $0x130] sm:$0xff]
      %v958 = vld [vmem:[#allocation2 + $0x138] sm:$0xff]
      %v959 = vld [vmem:[#allocation2 + $0x140] sm:$0xff]
      %v960 = vld [vmem:[#allocation2 + $0x148] sm:$0xff]
      %v961 = vld [vmem:[#allocation2 + $0x150] sm:$0xff]
      %v962 = vld [vmem:[#allocation2 + $0x158] sm:$0xff]
      %v963 = vld [vmem:[#allocation2 + $0x160] sm:$0xff]
      %v964 = vld [vmem:[#allocation2 + $0x168] sm:$0xff]
      %v965 = vld [vmem:[#allocation2 + $0x170] sm:$0xff]
      %v966 = vld [vmem:[#allocation2 + $0x178] sm:$0xff]
      %v967 = vld [vmem:[#allocation2 + $0x180] sm:$0xff]
      %v968 = vld [vmem:[#allocation2 + $0x188] sm:$0xff]
      %v969 = vld [vmem:[#allocation2 + $0x190] sm:$0xff]
      %v970 = vld [vmem:[#allocation2 + $0x198] sm:$0xff]
      %v971 = vld [vmem:[#allocation2 + $0x1a0] sm:$0xff]
      %v972 = vld [vmem:[#allocation2 + $0x1a8] sm:$0xff]
      %v973 = vld [vmem:[#allocation2 + $0x1b0] sm:$0xff]
      %v974 = vld [vmem:[#allocation2 + $0x1b8] sm:$0xff]
      %v975 = vld [vmem:[#allocation2 + $0x1c0] sm:$0xff]
      %v976 = vld [vmem:[#allocation2 + $0x1c8] sm:$0xff]
      %v977 = vld [vmem:[#allocation2 + $0x1d0] sm:$0xff]
      %v978 = vld [vmem:[#allocation2 + $0x1d8] sm:$0xff]
      %v979 = vld [vmem:[#allocation2 + $0x1e0] sm:$0xff]
      %v980 = vld [vmem:[#allocation2 + $0x1e8] sm:$0xff]
      %v981 = vld [vmem:[#allocation2 + $0x1f0] sm:$0xff]
      %v982 = vld [vmem:[#allocation2 + $0x1f8] sm:$0xff]
      %v983 = vld [vmem:[%s2] sm:$0x1]
      %v985 = vlaneseq
      %v986 = vshrl.u32 %v985, 7
      %v987 = vsub.s32 0, %v986
      %v988 = vrot.slane %v983, %v987
      %v990 = vmul.f32 %v919, %v988
      %v991 = vmul.f32 %v920, %v988
      %v992 = vmul.f32 %v921, %v988
      %v993 = vmul.f32 %v922, %v988
      %v994 = vmul.f32 %v923, %v988
      %v995 = vmul.f32 %v924, %v988
      %v996 = vmul.f32 %v925, %v988
      %v997 = vmul.f32 %v926, %v988
      %v998 = vmul.f32 %v927, %v988
      %v999 = vmul.f32 %v928, %v988
      %v1000 = vmul.f32 %v929, %v988
      %v1001 = vmul.f32 %v930, %v988
      %v1002 = vmul.f32 %v931, %v988
      %v1003 = vmul.f32 %v932, %v988
      %v1004 = vmul.f32 %v933, %v988
      %v1005 = vmul.f32 %v934, %v988
      %v1006 = vmul.f32 %v935, %v988
      %v1007 = vmul.f32 %v936, %v988
      %v1008 = vmul.f32 %v937, %v988
      %v1009 = vmul.f32 %v938, %v988
      %v1010 = vmul.f32 %v939, %v988
      %v1011 = vmul.f32 %v940, %v988
      %v1012 = vmul.f32 %v941, %v988
      %v1013 = vmul.f32 %v942, %v988
      %v1014 = vmul.f32 %v943, %v988
      %v1015 = vmul.f32 %v944, %v988
      %v1016 = vmul.f32 %v945, %v988
      %v1017 = vmul.f32 %v946, %v988
      %v1018 = vmul.f32 %v947, %v988
      %v1019 = vmul.f32 %v948, %v988
      %v1020 = vmul.f32 %v949, %v988
      %v1021 = vmul.f32 %v950, %v988
      %v1022 = vmul.f32 %v951, %v988
      %v1023 = vmul.f32 %v952, %v988
      %v1024 = vmul.f32 %v953, %v988
      %v1025 = vmul.f32 %v954, %v988
      %v1026 = vmul.f32 %v955, %v988
      %v1027 = vmul.f32 %v956, %v988
      %v1028 = vmul.f32 %v957, %v988
      %v1029 = vmul.f32 %v958, %v988
      %v1030 = vmul.f32 %v959, %v988
      %v1031 = vmul.f32 %v960, %v988
      %v1032 = vmul.f32 %v961, %v988
      %v1033 = vmul.f32 %v962, %v988
      %v1034 = vmul.f32 %v963, %v988
      %v1035 = vmul.f32 %v964, %v988
      %v1036 = vmul.f32 %v965, %v988
      %v1037 = vmul.f32 %v966, %v988
      %v1038 = vmul.f32 %v967, %v988
      %v1039 = vmul.f32 %v968, %v988
      %v1040 = vmul.f32 %v969, %v988
      %v1041 = vmul.f32 %v970, %v988
      %v1042 = vmul.f32 %v971, %v988
      %v1043 = vmul.f32 %v972, %v988
      %v1044 = vmul.f32 %v973, %v988
      %v1045 = vmul.f32 %v974, %v988
      %v1046 = vmul.f32 %v975, %v988
      %v1047 = vmul.f32 %v976, %v988
      %v1048 = vmul.f32 %v977, %v988
      %v1049 = vmul.f32 %v978, %v988
      %v1050 = vmul.f32 %v979, %v988
      %v1051 = vmul.f32 %v980, %v988
      %v1052 = vmul.f32 %v981, %v988
      %v1053 = vmul.f32 %v982, %v988
      %v1054 = vld [vmem:[%s3] sm:$0x1]
      %v1056 = vlaneseq
      %v1057 = vshrl.u32 %v1056, 7
      %v1058 = vsub.s32 0, %v1057
      %v1059 = vrot.slane %v1054, %v1058
      %v1061 = vadd.f32 %v990, %v1059
      %v1062 = vadd.f32 %v991, %v1059
      %v1063 = vadd.f32 %v992, %v1059
      %v1064 = vadd.f32 %v993, %v1059
      %v1065 = vadd.f32 %v994, %v1059
      %v1066 = vadd.f32 %v995, %v1059
      %v1067 = vadd.f32 %v996, %v1059
      %v1068 = vadd.f32 %v997, %v1059
      %v1069 = vadd.f32 %v998, %v1059
      %v1070 = vadd.f32 %v999, %v1059
      %v1071 = vadd.f32 %v1000, %v1059
      %v1072 = vadd.f32 %v1001, %v1059
      %v1073 = vadd.f32 %v1002, %v1059
      %v1074 = vadd.f32 %v1003, %v1059
      %v1075 = vadd.f32 %v1004, %v1059
      %v1076 = vadd.f32 %v1005, %v1059
      %v1077 = vadd.f32 %v1006, %v1059
      %v1078 = vadd.f32 %v1007, %v1059
      %v1079 = vadd.f32 %v1008, %v1059
      %v1080 = vadd.f32 %v1009, %v1059
      %v1081 = vadd.f32 %v1010, %v1059
      %v1082 = vadd.f32 %v1011, %v1059
      %v1083 = vadd.f32 %v1012, %v1059
      %v1084 = vadd.f32 %v1013, %v1059
      %v1085 = vadd.f32 %v1014, %v1059
      %v1086 = vadd.f32 %v1015, %v1059
      %v1087 = vadd.f32 %v1016, %v1059
      %v1088 = vadd.f32 %v1017, %v1059
      %v1089 = vadd.f32 %v1018, %v1059
      %v1090 = vadd.f32 %v1019, %v1059
      %v1091 = vadd.f32 %v1020, %v1059
      %v1092 = vadd.f32 %v1021, %v1059
      %v1093 = vadd.f32 %v1022, %v1059
      %v1094 = vadd.f32 %v1023, %v1059
      %v1095 = vadd.f32 %v1024, %v1059
      %v1096 = vadd.f32 %v1025, %v1059
      %v1097 = vadd.f32 %v1026, %v1059
      %v1098 = vadd.f32 %v1027, %v1059
      %v1099 = vadd.f32 %v1028, %v1059
      %v1100 = vadd.f32 %v1029, %v1059
      %v1101 = vadd.f32 %v1030, %v1059
      %v1102 = vadd.f32 %v1031, %v1059
      %v1103 = vadd.f32 %v1032, %v1059
      %v1104 = vadd.f32 %v1033, %v1059
      %v1105 = vadd.f32 %v1034, %v1059
      %v1106 = vadd.f32 %v1035, %v1059
      %v1107 = vadd.f32 %v1036, %v1059
      %v1108 = vadd.f32 %v1037, %v1059
      %v1109 = vadd.f32 %v1038, %v1059
      %v1110 = vadd.f32 %v1039, %v1059
      %v1111 = vadd.f32 %v1040, %v1059
      %v1112 = vadd.f32 %v1041, %v1059
      %v1113 = vadd.f32 %v1042, %v1059
      %v1114 = vadd.f32 %v1043, %v1059
      %v1115 = vadd.f32 %v1044, %v1059
      %v1116 = vadd.f32 %v1045, %v1059
      %v1117 = vadd.f32 %v1046, %v1059
      %v1118 = vadd.f32 %v1047, %v1059
      %v1119 = vadd.f32 %v1048, %v1059
      %v1120 = vadd.f32 %v1049, %v1059
      %v1121 = vadd.f32 %v1050, %v1059
      %v1122 = vadd.f32 %v1051, %v1059
      %v1123 = vadd.f32 %v1052, %v1059
      %v1124 = vadd.f32 %v1053, %v1059
      %v1125 = vpack.c.bf16 %v1062, %v1061
      %v1126 = vpack.c.bf16 %v1064, %v1063
      %v1127 = vpack.c.bf16 %v1066, %v1065
      %v1128 = vpack.c.bf16 %v1068, %v1067
      %v1129 = vpack.c.bf16 %v1070, %v1069
      %v1130 = vpack.c.bf16 %v1072, %v1071
      %v1131 = vpack.c.bf16 %v1074, %v1073
      %v1132 = vpack.c.bf16 %v1076, %v1075
      %v1133 = vpack.c.bf16 %v1078, %v1077
      %v1134 = vpack.c.bf16 %v1080, %v1079
      %v1135 = vpack.c.bf16 %v1082, %v1081
      %v1136 = vpack.c.bf16 %v1084, %v1083
      %v1137 = vpack.c.bf16 %v1086, %v1085
      %v1138 = vpack.c.bf16 %v1088, %v1087
      %v1139 = vpack.c.bf16 %v1090, %v1089
      %v1140 = vpack.c.bf16 %v1092, %v1091
      %v1141 = vpack.c.bf16 %v1094, %v1093
      %v1142 = vpack.c.bf16 %v1096, %v1095
      %v1143 = vpack.c.bf16 %v1098, %v1097
      %v1144 = vpack.c.bf16 %v1100, %v1099
      %v1145 = vpack.c.bf16 %v1102, %v1101
      %v1146 = vpack.c.bf16 %v1104, %v1103
      %v1147 = vpack.c.bf16 %v1106, %v1105
      %v1148 = vpack.c.bf16 %v1108, %v1107
      %v1149 = vpack.c.bf16 %v1110, %v1109
      %v1150 = vpack.c.bf16 %v1112, %v1111
      %v1151 = vpack.c.bf16 %v1114, %v1113
      %v1152 = vpack.c.bf16 %v1116, %v1115
      %v1153 = vpack.c.bf16 %v1118, %v1117
      %v1154 = vpack.c.bf16 %v1120, %v1119
      %v1155 = vpack.c.bf16 %v1122, %v1121
      %v1156 = vpack.c.bf16 %v1124, %v1123
      %v1189 = vunpack.c.l.b16 %v1125
      %v1190 = vunpack.c.h.b16 %v1125
      %v1191 = vunpack.c.l.b16 %v1126
      %v1192 = vunpack.c.h.b16 %v1126
      %v1193 = vunpack.c.l.b16 %v1127
      %v1194 = vunpack.c.h.b16 %v1127
      %v1195 = vunpack.c.l.b16 %v1128
      %v1196 = vunpack.c.h.b16 %v1128
      %v1197 = vunpack.c.l.b16 %v1129
      %v1198 = vunpack.c.h.b16 %v1129
      %v1199 = vunpack.c.l.b16 %v1130
      %v1200 = vunpack.c.h.b16 %v1130
      %v1201 = vunpack.c.l.b16 %v1131
      %v1202 = vunpack.c.h.b16 %v1131
      %v1203 = vunpack.c.l.b16 %v1132
      %v1204 = vunpack.c.h.b16 %v1132
      %v1205 = vunpack.c.l.b16 %v1133
      %v1206 = vunpack.c.h.b16 %v1133
      %v1207 = vunpack.c.l.b16 %v1134
      %v1208 = vunpack.c.h.b16 %v1134
      %v1209 = vunpack.c.l.b16 %v1135
      %v1210 = vunpack.c.h.b16 %v1135
      %v1211 = vunpack.c.l.b16 %v1136
      %v1212 = vunpack.c.h.b16 %v1136
      %v1213 = vunpack.c.l.b16 %v1137
      %v1214 = vunpack.c.h.b16 %v1137
      %v1215 = vunpack.c.l.b16 %v1138
      %v1216 = vunpack.c.h.b16 %v1138
      %v1217 = vunpack.c.l.b16 %v1139
      %v1218 = vunpack.c.h.b16 %v1139
      %v1219 = vunpack.c.l.b16 %v1140
      %v1220 = vunpack.c.h.b16 %v1140
      %v1221 = vunpack.c.l.b16 %v1141
      %v1222 = vunpack.c.h.b16 %v1141
      %v1223 = vunpack.c.l.b16 %v1142
      %v1224 = vunpack.c.h.b16 %v1142
      %v1225 = vunpack.c.l.b16 %v1143
      %v1226 = vunpack.c.h.b16 %v1143
      %v1227 = vunpack.c.l.b16 %v1144
      %v1228 = vunpack.c.h.b16 %v1144
      %v1229 = vunpack.c.l.b16 %v1145
      %v1230 = vunpack.c.h.b16 %v1145
      %v1231 = vunpack.c.l.b16 %v1146
      %v1232 = vunpack.c.h.b16 %v1146
      %v1233 = vunpack.c.l.b16 %v1147
      %v1234 = vunpack.c.h.b16 %v1147
      %v1235 = vunpack.c.l.b16 %v1148
      %v1236 = vunpack.c.h.b16 %v1148
      %v1237 = vunpack.c.l.b16 %v1149
      %v1238 = vunpack.c.h.b16 %v1149
      %v1239 = vunpack.c.l.b16 %v1150
      %v1240 = vunpack.c.h.b16 %v1150
      %v1241 = vunpack.c.l.b16 %v1151
      %v1242 = vunpack.c.h.b16 %v1151
      %v1243 = vunpack.c.l.b16 %v1152
      %v1244 = vunpack.c.h.b16 %v1152
      %v1245 = vunpack.c.l.b16 %v1153
      %v1246 = vunpack.c.h.b16 %v1153
      %v1247 = vunpack.c.l.b16 %v1154
      %v1248 = vunpack.c.h.b16 %v1154
      %v1249 = vunpack.c.l.b16 %v1155
      %v1250 = vunpack.c.h.b16 %v1155
      %v1251 = vunpack.c.l.b16 %v1156
      %v1252 = vunpack.c.h.b16 %v1156
      %v1253 = vpack.c.b16 %v1189, %v1189
      %v1254 = vpack.c.b16 %v1190, %v1190
      %v1255 = vpack.c.b16 %v1191, %v1191
      %v1256 = vpack.c.b16 %v1192, %v1192
      %v1257 = vpack.c.b16 %v1193, %v1193
      %v1258 = vpack.c.b16 %v1194, %v1194
      %v1259 = vpack.c.b16 %v1195, %v1195
      %v1260 = vpack.c.b16 %v1196, %v1196
      %v1261 = vpack.c.b16 %v1197, %v1197
      %v1262 = vpack.c.b16 %v1198, %v1198
      %v1263 = vpack.c.b16 %v1199, %v1199
      %v1264 = vpack.c.b16 %v1200, %v1200
      %v1265 = vpack.c.b16 %v1201, %v1201
      %v1266 = vpack.c.b16 %v1202, %v1202
      %v1267 = vpack.c.b16 %v1203, %v1203
      %v1268 = vpack.c.b16 %v1204, %v1204
      %v1269 = vpack.c.b16 %v1205, %v1205
      %v1270 = vpack.c.b16 %v1206, %v1206
      %v1271 = vpack.c.b16 %v1207, %v1207
      %v1272 = vpack.c.b16 %v1208, %v1208
      %v1273 = vpack.c.b16 %v1209, %v1209
      %v1274 = vpack.c.b16 %v1210, %v1210
      %v1275 = vpack.c.b16 %v1211, %v1211
      %v1276 = vpack.c.b16 %v1212, %v1212
      %v1277 = vpack.c.b16 %v1213, %v1213
      %v1278 = vpack.c.b16 %v1214, %v1214
      %v1279 = vpack.c.b16 %v1215, %v1215
      %v1280 = vpack.c.b16 %v1216, %v1216
      %v1281 = vpack.c.b16 %v1217, %v1217
      %v1282 = vpack.c.b16 %v1218, %v1218
      %v1283 = vpack.c.b16 %v1219, %v1219
      %v1284 = vpack.c.b16 %v1220, %v1220
      %v1285 = vpack.c.b16 %v1221, %v1221
      %v1286 = vpack.c.b16 %v1222, %v1222
      %v1287 = vpack.c.b16 %v1223, %v1223
      %v1288 = vpack.c.b16 %v1224, %v1224
      %v1289 = vpack.c.b16 %v1225, %v1225
      %v1290 = vpack.c.b16 %v1226, %v1226
      %v1291 = vpack.c.b16 %v1227, %v1227
      %v1292 = vpack.c.b16 %v1228, %v1228
      %v1293 = vpack.c.b16 %v1229, %v1229
      %v1294 = vpack.c.b16 %v1230, %v1230
      %v1295 = vpack.c.b16 %v1231, %v1231
      %v1296 = vpack.c.b16 %v1232, %v1232
      %v1297 = vpack.c.b16 %v1233, %v1233
      %v1298 = vpack.c.b16 %v1234, %v1234
      %v1299 = vpack.c.b16 %v1235, %v1235
      %v1300 = vpack.c.b16 %v1236, %v1236
      %v1301 = vpack.c.b16 %v1237, %v1237
      %v1302 = vpack.c.b16 %v1238, %v1238
      %v1303 = vpack.c.b16 %v1239, %v1239
      %v1304 = vpack.c.b16 %v1240, %v1240
      %v1305 = vpack.c.b16 %v1241, %v1241
      %v1306 = vpack.c.b16 %v1242, %v1242
      %v1307 = vpack.c.b16 %v1243, %v1243
      %v1308 = vpack.c.b16 %v1244, %v1244
      %v1309 = vpack.c.b16 %v1245, %v1245
      %v1310 = vpack.c.b16 %v1246, %v1246
      %v1311 = vpack.c.b16 %v1247, %v1247
      %v1312 = vpack.c.b16 %v1248, %v1248
      %v1313 = vpack.c.b16 %v1249, %v1249
      %v1314 = vpack.c.b16 %v1250, %v1250
      %v1315 = vpack.c.b16 %v1251, %v1251
      %v1316 = vpack.c.b16 %v1252, %v1252
      %1381 = vst [vmem:[#allocation8] sm:$0xf] %v1253
      %1382 = vst [vmem:[#allocation8 + $0x4] sm:$0xf] %v1254
      %1383 = vst [vmem:[#allocation8 + $0x8] sm:$0xf] %v1255
      %1384 = vst [vmem:[#allocation8 + $0xc] sm:$0xf] %v1256
      %1385 = vst [vmem:[#allocation8 + $0x10] sm:$0xf] %v1257
      %1386 = vst [vmem:[#allocation8 + $0x14] sm:$0xf] %v1258
      %1387 = vst [vmem:[#allocation8 + $0x18] sm:$0xf] %v1259
      %1388 = vst [vmem:[#allocation8 + $0x1c] sm:$0xf] %v1260
      %1389 = vst [vmem:[#allocation8 + $0x20] sm:$0xf] %v1261
      %1390 = vst [vmem:[#allocation8 + $0x24] sm:$0xf] %v1262
      %1391 = vst [vmem:[#allocation8 + $0x28] sm:$0xf] %v1263
      %1392 = vst [vmem:[#allocation8 + $0x2c] sm:$0xf] %v1264
      %1393 = vst [vmem:[#allocation8 + $0x30] sm:$0xf] %v1265
      %1394 = vst [vmem:[#allocation8 + $0x34] sm:$0xf] %v1266
      %1395 = vst [vmem:[#allocation8 + $0x38] sm:$0xf] %v1267
      %1396 = vst [vmem:[#allocation8 + $0x3c] sm:$0xf] %v1268
      %1397 = vst [vmem:[#allocation8 + $0x40] sm:$0xf] %v1269
      %1398 = vst [vmem:[#allocation8 + $0x44] sm:$0xf] %v1270
      %1399 = vst [vmem:[#allocation8 + $0x48] sm:$0xf] %v1271
      %1400 = vst [vmem:[#allocation8 + $0x4c] sm:$0xf] %v1272
      %1401 = vst [vmem:[#allocation8 + $0x50] sm:$0xf] %v1273
      %1402 = vst [vmem:[#allocation8 + $0x54] sm:$0xf] %v1274
      %1403 = vst [vmem:[#allocation8 + $0x58] sm:$0xf] %v1275
      %1404 = vst [vmem:[#allocation8 + $0x5c] sm:$0xf] %v1276
      %1405 = vst [vmem:[#allocation8 + $0x60] sm:$0xf] %v1277
      %1406 = vst [vmem:[#allocation8 + $0x64] sm:$0xf] %v1278
      %1407 = vst [vmem:[#allocation8 + $0x68] sm:$0xf] %v1279
      %1408 = vst [vmem:[#allocation8 + $0x6c] sm:$0xf] %v1280
      %1409 = vst [vmem:[#allocation8 + $0x70] sm:$0xf] %v1281
      %1410 = vst [vmem:[#allocation8 + $0x74] sm:$0xf] %v1282
      %1411 = vst [vmem:[#allocation8 + $0x78] sm:$0xf] %v1283
      %1412 = vst [vmem:[#allocation8 + $0x7c] sm:$0xf] %v1284
      %1413 = vst [vmem:[#allocation8 + $0x80] sm:$0xf] %v1285
      %1414 = vst [vmem:[#allocation8 + $0x84] sm:$0xf] %v1286
      %1415 = vst [vmem:[#allocation8 + $0x88] sm:$0xf] %v1287
      %1416 = vst [vmem:[#allocation8 + $0x8c] sm:$0xf] %v1288
      %1417 = vst [vmem:[#allocation8 + $0x90] sm:$0xf] %v1289
      %1418 = vst [vmem:[#allocation8 + $0x94] sm:$0xf] %v1290
      %1419 = vst [vmem:[#allocation8 + $0x98] sm:$0xf] %v1291
      %1420 = vst [vmem:[#allocation8 + $0x9c] sm:$0xf] %v1292
      %1421 = vst [vmem:[#allocation8 + $0xa0] sm:$0xf] %v1293
      %1422 = vst [vmem:[#allocation8 + $0xa4] sm:$0xf] %v1294
      %1423 = vst [vmem:[#allocation8 + $0xa8] sm:$0xf] %v1295
      %1424 = vst [vmem:[#allocation8 + $0xac] sm:$0xf] %v1296
      %1425 = vst [vmem:[#allocation8 + $0xb0] sm:$0xf] %v1297
      %1426 = vst [vmem:[#allocation8 + $0xb4] sm:$0xf] %v1298
      %1427 = vst [vmem:[#allocation8 + $0xb8] sm:$0xf] %v1299
      %1428 = vst [vmem:[#allocation8 + $0xbc] sm:$0xf] %v1300
      %1429 = vst [vmem:[#allocation8 + $0xc0] sm:$0xf] %v1301
      %1430 = vst [vmem:[#allocation8 + $0xc4] sm:$0xf] %v1302
      %1431 = vst [vmem:[#allocation8 + $0xc8] sm:$0xf] %v1303
      %1432 = vst [vmem:[#allocation8 + $0xcc] sm:$0xf] %v1304
      %1433 = vst [vmem:[#allocation8 + $0xd0] sm:$0xf] %v1305
      %1434 = vst [vmem:[#allocation8 + $0xd4] sm:$0xf] %v1306
      %1435 = vst [vmem:[#allocation8 + $0xd8] sm:$0xf] %v1307
      %1436 = vst [vmem:[#allocation8 + $0xdc] sm:$0xf] %v1308
      %1437 = vst [vmem:[#allocation8 + $0xe0] sm:$0xf] %v1309
      %1438 = vst [vmem:[#allocation8 + $0xe4] sm:$0xf] %v1310
      %1439 = vst [vmem:[#allocation8 + $0xe8] sm:$0xf] %v1311
      %1440 = vst [vmem:[#allocation8 + $0xec] sm:$0xf] %v1312
      %1441 = vst [vmem:[#allocation8 + $0xf0] sm:$0xf] %v1313
      %1442 = vst [vmem:[#allocation8 + $0xf4] sm:$0xf] %v1314
      %1443 = vst [vmem:[#allocation8 + $0xf8] sm:$0xf] %v1315
      %1444 = vst [vmem:[#allocation8 + $0xfc] sm:$0xf] %v1316
    $region33: #{tpu_custom_call.1} parent=1 // pred_fallthru
      _
    // Predicated region
    $region34: #{tpu_custom_call.1} parent=1 // pred_check
      _
    $region35: #{tpu_custom_call.1} parent=1 // pred_check_branch
      %1446 = sbr.rel (0) target = $region37
    $region36: #{tpu_custom_call.1} parent=1 // pred_region
      %s1448 = ssub.s32 4096, 4096
      %1449 = vsyncadd [#allocation5], %s1448
      %s1450 = sshll.u32 [#allocation8], 4
      %s1451 = int_to_ptr.vmem [resolvable:$true] %s1450
      %1456 = dma.vmem_to_hbm [thread:$0]  %s1451, 4096, %s4, [#allocation5], 64, 64, 4
    $region37: #{tpu_custom_call.1} parent=1 // pred_fallthru
      _
    // Predicated region
    $region38: #{tpu_custom_call.1} parent=1 // pred_check
      _
    $region39: #{tpu_custom_call.1} parent=1 // pred_check_branch
      %1458 = sbr.rel (0) target = $region41
    $region40: #{tpu_custom_call.1} parent=1 // pred_region
      %1459 = dma.done [#allocation5], 4096
    $region41: #{tpu_custom_call.1} parent=1 // pred_fallthru
      _
    %1460 = vsyncpa [#allocation4], 1
    %1461 = vsyncpa [#allocation7], 1
    %1462 = vsyncpa [#allocation5], 1

</llo_original>
